<compile_context>
chip_gen: v7x
topology: tpu7x:2x2x1
jax: 0.10.0
libtpu: 0.0.40
codegen_flags: <defaults>
</compile_context>

<pallas_src>
import math
import numpy as np
import jax
import jax.numpy as jnp
from jax.experimental import pallas as pl
from jax.experimental.pallas import tpu as pltpu

NB201_OPS = ("none", "skip_connect", "nor_conv_1x1", "nor_conv_3x3", "avg_pool_3x3")
NUM_VERTICES = 4
BN_EPS = 1e-5


def _valid_sets(genotype, num_vertices):
    """Replicates the PyTorch forward's valid_input / valid_output derivation exactly."""
    valid_input = [0]
    for to_ in range(1, num_vertices):
        for input_ in valid_input:
            if genotype[to_][input_] > 0:
                valid_input.append(to_)
                break
    valid_output = [num_vertices - 1]
    for from_ in range(num_vertices - 2, -1, -1):
        for output_ in valid_output:
            if genotype[output_][from_] > 0:
                valid_output.append(from_)
    return valid_input, valid_output


# -------------------------- host-side (trace-time) constant builders --------------------------

def _diag_weight(w1, W, Cc):
    """1x1 conv as a block-diagonal (L, L) matrix: lane (w*Cc+ci) -> lane (w*Cc+co)."""
    Cout, Cin = w1.shape[0], w1.shape[1]
    L = W * Cc
    m = np.zeros((L, L), np.float32)
    blk = w1[:, :, 0, 0].T                                 # (Cin, Cout)
    for w in range(W):
        m[w * Cc:w * Cc + Cin, w * Cc:w * Cc + Cout] = blk
    return jnp.asarray(m, dtype=jnp.bfloat16)              # bf16 MXU operand


def _band_weight(w3, W, Cc):
    """3x3 conv im2col weight: (3L, L).  Row block kh holds the banded (w-tap x Cin) map."""
    Cout, Cin = w3.shape[0], w3.shape[1]
    L = W * Cc
    m = np.zeros((3, L, L), np.float32)
    for kh in range(3):
        for w in range(W):
            for kw in range(3):
                wp = w + kw - 1
                if 0 <= wp < W:
                    m[kh, wp * Cc:wp * Cc + Cin, w * Cc:w * Cc + Cout] = w3[:, :, kh, kw].T
    return jnp.asarray(m.reshape(3 * L, L), dtype=jnp.bfloat16)


def _row_shift_mats(N, H):
    """0/1 row-shift matrices (R, R): up = take h-1 (zero at h=0), dn = take h+1, sv = 3-row sum."""
    R = N * H
    shu = np.zeros((R, R), np.float32)
    shd = np.zeros((R, R), np.float32)
    for r in range(R):
        if r % H != 0:
            shu[r, r - 1] = 1.0
        if r % H != H - 1:
            shd[r, r + 1] = 1.0
    sv = shu + shd + np.eye(R, dtype=np.float32)
    return jnp.asarray(shu), jnp.asarray(shd), jnp.asarray(sv)


def _lane_mats(W, Cc):
    """sc: per-channel sum+broadcast over all w lanes.  pband: 3-wide w-window sum per channel."""
    L = W * Cc
    idx = np.arange(L)
    same_c = (idx[:, None] % Cc) == (idx[None, :] % Cc)
    near_w = np.abs(idx[:, None] // Cc - idx[None, :] // Cc) <= 1
    return (jnp.asarray(same_c.astype(np.float32)),
            jnp.asarray((same_c & near_w).astype(np.float32)))


def _inv_count(N, H, W, Cc):
    """Reciprocal valid-neighbour counts for AvgPool(3, s=1, p=1, count_include_pad=False)."""
    ch = 3.0 - (np.arange(H) == 0) - (np.arange(H) == H - 1)
    cw = 3.0 - (np.arange(W) == 0) - (np.arange(W) == W - 1)
    inv = (1.0 / np.outer(ch, cw)).astype(np.float32)                      # (H, W)
    full = np.broadcast_to(inv[None, :, :, None], (N, H, W, Cc)).reshape(N * H, W * Cc)
    return jnp.asarray(np.ascontiguousarray(full))


# ---------------------------------------- fused kernel ----------------------------------------

def _build_cell_kernel(plan, n_w, R, L, inv_total):
    """plan: list of (to_, edges); each edge = (kind, weight_slot, from_) with 'none' dropped."""

    def kernel(x_ref, shu_ref, shd_ref, sv_ref, sc_ref, pband_ref, invc_ref, *rest):
        w_refs = rest[:n_w]
        out_ref = rest[n_w]

        def batch_norm(acc):                     # acc: (R, L) f32 — training-mode BN, no affine
            s1 = jnp.sum(acc, axis=0, keepdims=True)            # one traversal: sum
            s2 = jnp.sum(acc * acc, axis=0, keepdims=True)      #                and sum of squares
            stats = jnp.concatenate([s1, s2], axis=0)           # (2, L)
            # per-channel reduce over the w lanes + broadcast back, via one 0/1-matrix dot
            stats_b = jnp.dot(stats, sc_ref[...], preferred_element_type=jnp.float32)
            mean = stats_b[0:1] * inv_total
            ex2 = stats_b[1:2] * inv_total
            var = ex2 - mean * mean
            return (acc - mean) * jax.lax.rsqrt(var + BN_EPS)

        def conv1x1_bn(v, w_ref):                # ReLU -> 1x1 conv (one bf16 MXU dot) -> BN
            xb = jnp.maximum(v, 0.0).astype(jnp.bfloat16)
            y = jnp.dot(xb, w_ref[...], preferred_element_type=jnp.float32)
            return batch_norm(y)

        def conv3x3_bn(v, w_ref):                # ReLU -> 3x3 conv (im2col, one K=3L dot) -> BN
            xr = jnp.maximum(v, 0.0)
            up = jnp.dot(shu_ref[...], xr, preferred_element_type=jnp.float32)   # rows h-1
            dn = jnp.dot(shd_ref[...], xr, preferred_element_type=jnp.float32)   # rows h+1
            x3 = jnp.concatenate([up, xr, dn], axis=1).astype(jnp.bfloat16)      # (R, 3L)
            y = jnp.dot(x3, w_ref[...], preferred_element_type=jnp.float32)      # (R, L)
            return batch_norm(y)

        def avg_pool(v):                         # AvgPool2d(3, s=1, p=1, count_include_pad=False)
            s = jnp.dot(sv_ref[...], v, preferred_element_type=jnp.float32)      # h-window sum
            p = jnp.dot(s, pband_ref[...], preferred_element_type=jnp.float32)   # w-window sum
            return p * invc_ref[...]

        states = [x_ref[...]]                    # state 0: lane-dense input slab (prepped in XLA)
        for _, edges in plan:                    # to_ = 1 .. V-1, in order
            acc = None
            for kind, slot, from_ in edges:
                if kind == "skip":
                    contrib = states[from_]
                elif kind == "conv1":
                    contrib = conv1x1_bn(states[from_], w_refs[slot])
                elif kind == "conv3":
                    contrib = conv3x3_bn(states[from_], w_refs[slot])
                else:                            # "pool"
                    contrib = avg_pool(states[from_])
                acc = contrib if acc is None else acc + contrib
            if acc is None:                      # node receives nothing -> zeros (PyTorch semantics)
                acc = jnp.zeros((R, L), jnp.float32)
            states.append(acc)

        out_ref[...] = states[-1]                # full lane-dense (R, L) slab; slice in wrapper

    return kernel


class NB201SharedCellPallas:
    """JAX/Pallas re-implementation of aw_nas NB201SharedCell.forward (stride=1 cell)."""

    def __init__(self, key, num_channels, num_out_channels, stride=1, bn_affine=False):
        assert stride == 1 and num_channels == num_out_channels
        assert not bn_affine
        self.num_vertices = NUM_VERTICES
        self.C = num_channels
        self.weights = {}
        for f in range(self.num_vertices):
            for t in range(f + 1, self.num_vertices):
                ek = jax.random.fold_in(key, f * self.num_vertices + t)
                k1, k3 = jax.random.split(ek)
                w1 = 0.1 * jax.random.normal(k1, (num_out_channels, num_channels, 1, 1), jnp.float32)
                w3 = 0.1 * jax.random.normal(k3, (num_out_channels, num_channels, 3, 3), jnp.float32)
                # stored in PyTorch conv layout (Cout, Cin, kh, kw), as host numpy (trace-time use)
                self.weights[(f, t)] = {"nor_conv_1x1": np.asarray(w1),
                                        "nor_conv_3x3": np.asarray(w3)}

    def forward(self, inputs_nchw, genotype):
        x = jnp.transpose(inputs_nchw, (0, 2, 3, 1)).astype(jnp.float32)   # NCHW -> NHWC
        N, H, W, C = x.shape
        V = self.num_vertices

        # Channel-pack width so that the lane dim L = W*Cc is a multiple of 128 (lane-dense).
        k = 128 // math.gcd(W, 128)
        Cc = ((C + k - 1) // k) * k
        L, R = W * Cc, N * H

        valid_input, valid_output = _valid_sets(genotype, V)

        # Static execution plan ('none' and invalid edges dropped at trace time).
        plan, weight_args = [], []
        for to_ in range(1, V):
            edges = []
            for from_ in range(to_):
                if not (from_ in valid_input and to_ in valid_output):
                    continue
                op = NB201_OPS[int(genotype[to_][from_])]
                if op == "none":
                    continue
                if op == "skip_connect":
                    edges.append(("skip", None, from_))
                elif op == "nor_conv_1x1":
                    edges.append(("conv1", len(weight_args), from_))
                    weight_args.append(_diag_weight(self.weights[(from_, to_)]["nor_conv_1x1"], W, Cc))
                elif op == "nor_conv_3x3":
                    edges.append(("conv3", len(weight_args), from_))
                    weight_args.append(_band_weight(self.weights[(from_, to_)]["nor_conv_3x3"], W, Cc))
                else:
                    edges.append(("pool", None, from_))
            plan.append((to_, edges))

        # Tiny 0/1 helper matrices + pooling reciprocal counts, built on the host (trace time).
        shu, shd, sv = _row_shift_mats(N, H)
        sc, pband = _lane_mats(W, Cc)
        invc = _inv_count(N, H, W, Cc)

        # Wrapper-side layout prep: channel pad + pack to the lane-dense (R, L) slab.
        x2d = jnp.pad(x, ((0, 0), (0, 0), (0, 0), (0, Cc - C))).reshape(R, L)

        kernel = _build_cell_kernel(plan, len(weight_args), R, L, 1.0 / float(N * H * W))
        vmem = pl.BlockSpec(memory_space=pltpu.MemorySpace.VMEM)

        out2d = pl.pallas_call(
            kernel,
            out_shape=jax.ShapeDtypeStruct((R, L), jnp.float32),
            in_specs=[vmem] * (7 + len(weight_args)),
            out_specs=vmem,
            compiler_params=pltpu.CompilerParams(vmem_limit_bytes=32 * 1024 * 1024),
        )(x2d, shu, shd, sv, sc, pband, invc, *weight_args)

        # Wrapper-side un-packing: lane-dense slab -> NHWC -> drop pad channels -> NCHW.
        out = out2d.reshape(N, H, W, Cc)[..., :C]
        return jnp.transpose(out, (0, 3, 1, 2))


# ---------------------------- pure-JAX reference (for checking) ----------------------------

def _reference_forward(cell, inputs_nchw, genotype):
    x = jnp.transpose(inputs_nchw, (0, 2, 3, 1)).astype(jnp.float32)
    V = cell.num_vertices
    valid_input, valid_output = _valid_sets(genotype, V)

    def relu_conv_bn(v, w_oihw):
        w = jnp.transpose(jnp.asarray(w_oihw, jnp.float32), (2, 3, 1, 0))   # OIHW -> HWIO
        p = w.shape[0] // 2
        y = jax.lax.conv_general_dilated(
            jnp.maximum(v, 0.0), w, window_strides=(1, 1),
            padding=[(p, p), (p, p)], dimension_numbers=("NHWC", "HWIO", "NHWC"),
            precision=jax.lax.Precision.HIGHEST)
        mean = jnp.mean(y, axis=(0, 1, 2), keepdims=True)
        var = jnp.mean((y - mean) ** 2, axis=(0, 1, 2), keepdims=True)
        return (y - mean) * jax.lax.rsqrt(var + BN_EPS)

    def avg_pool(v):
        pad = [(0, 0), (1, 1), (1, 1), (0, 0)]
        s = jax.lax.reduce_window(v, 0.0, jax.lax.add, (1, 3, 3, 1), (1, 1, 1, 1), pad)
        cnt = jax.lax.reduce_window(jnp.ones_like(v), 0.0, jax.lax.add,
                                    (1, 3, 3, 1), (1, 1, 1, 1), pad)
        return s / cnt

    states = [x]
    for to_ in range(1, V):
        st = jnp.zeros_like(x)
        for from_ in range(to_):
            if from_ in valid_input and to_ in valid_output:
                op = NB201_OPS[int(genotype[to_][from_])]
                if op == "none":
                    out = jnp.zeros_like(x)
                elif op == "skip_connect":
                    out = states[from_]
                elif op == "nor_conv_1x1":
                    out = relu_conv_bn(states[from_], cell.weights[(from_, to_)]["nor_conv_1x1"])
                elif op == "nor_conv_3x3":
                    out = relu_conv_bn(states[from_], cell.weights[(from_, to_)]["nor_conv_3x3"])
                else:
                    out = avg_pool(states[from_])
                st = st + out
        states.append(st)
    return jnp.transpose(states[-1], (0, 3, 1, 2))


if __name__ == "__main__":
    key = jax.random.PRNGKey(0)
    kx, kw = jax.random.split(key)

    N, C, H, W = 2, 4, 16, 16
    x = jax.random.normal(kx, (N, C, H, W), jnp.float32)

    # genotype[to][from] = op index into NB201_OPS
    genotype = np.array(
        [[0, 0, 0, 0],
         [3, 0, 0, 0],   # 0 -> 1 : nor_conv_3x3
         [2, 1, 0, 0],   # 0 -> 2 : nor_conv_1x1, 1 -> 2 : skip_connect
         [4, 0, 3, 0]],  # 0 -> 3 : avg_pool_3x3, 1 -> 3 : none, 2 -> 3 : nor_conv_3x3
        dtype=np.int64)

    cell = NB201SharedCellPallas(kw, num_channels=C, num_out_channels=C, stride=1, bn_affine=False)
    run = jax.jit(lambda a: cell.forward(a, genotype))
    out = run(x)
    jax.block_until_ready(out)
    assert out.shape == (N, C, H, W) and out.dtype == jnp.float32

    ref = jax.jit(lambda a: _reference_forward(cell, a, genotype))(x)
    jax.block_until_ready(ref)
    np.testing.assert_allclose(np.asarray(out), np.asarray(ref), rtol=2e-2, atol=2e-2)

    print("KERNEL_OK")
</pallas_src>

<mosaic_0001>
module attributes {stable_mosaic.version = 11 : i64} {
  func.func @kernel(%arg0: memref<32x128xf32, #tpu.memory_space<vmem>>, %arg1: memref<32x32xf32, #tpu.memory_space<vmem>>, %arg2: memref<32x32xf32, #tpu.memory_space<vmem>>, %arg3: memref<32x32xf32, #tpu.memory_space<vmem>>, %arg4: memref<128x128xf32, #tpu.memory_space<vmem>>, %arg5: memref<128x128xf32, #tpu.memory_space<vmem>>, %arg6: memref<32x128xf32, #tpu.memory_space<vmem>>, %arg7: memref<384x128xbf16, #tpu.memory_space<vmem>>, %arg8: memref<128x128xbf16, #tpu.memory_space<vmem>>, %arg9: memref<384x128xbf16, #tpu.memory_space<vmem>>, %arg10: memref<32x128xf32, #tpu.memory_space<vmem>>) attributes {dimension_semantics = [], scalar_prefetch = 0 : i64, scratch_operands = 0 : i64, tpu.core_type = #tpu.core_type<tc>} {
    %c0 = arith.constant 0 : index
    %c0_0 = arith.constant 0 : index
    %0 = vector.load %arg0[%c0, %c0_0] : memref<32x128xf32, #tpu.memory_space<vmem>>, vector<32x128xf32>
    %cst = arith.constant 0.000000e+00 : f32
    %1 = vector.broadcast %cst : f32 to vector<32x128xf32>
    %2 = arith.maximumf %0, %1 : vector<32x128xf32>
    %c0_1 = arith.constant 0 : index
    %c0_2 = arith.constant 0 : index
    %3 = vector.load %arg1[%c0_1, %c0_2] : memref<32x32xf32, #tpu.memory_space<vmem>>, vector<32x32xf32>
    %cst_3 = arith.constant dense<0.000000e+00> : vector<32x128xf32>
    %4 = tpu.matmul %3, %2, %cst_3 {dimension_numbers = #tpu.dot_dimension_numbers<[1], [0], [0], [1], [0, 0, 1, 1], [], []>} : vector<32x32xf32>, vector<32x128xf32>, vector<32x128xf32> -> vector<32x128xf32>
    %c0_4 = arith.constant 0 : index
    %c0_5 = arith.constant 0 : index
    %5 = vector.load %arg2[%c0_4, %c0_5] : memref<32x32xf32, #tpu.memory_space<vmem>>, vector<32x32xf32>
    %cst_6 = arith.constant dense<0.000000e+00> : vector<32x128xf32>
    %6 = tpu.matmul %5, %2, %cst_6 {dimension_numbers = #tpu.dot_dimension_numbers<[1], [0], [0], [1], [0, 0, 1, 1], [], []>} : vector<32x32xf32>, vector<32x128xf32>, vector<32x128xf32> -> vector<32x128xf32>
    %7 = tpu.concatenate %4, %2, %6 in 1 : vector<32x128xf32>, vector<32x128xf32>, vector<32x128xf32> -> vector<32x384xf32>
    %8 = arith.truncf %7 : vector<32x384xf32> to vector<32x384xbf16>
    %c0_7 = arith.constant 0 : index
    %c0_8 = arith.constant 0 : index
    %9 = vector.load %arg7[%c0_7, %c0_8] : memref<384x128xbf16, #tpu.memory_space<vmem>>, vector<384x128xbf16>
    %cst_9 = arith.constant dense<0.000000e+00> : vector<32x128xf32>
    %10 = tpu.matmul %8, %9, %cst_9 {dimension_numbers = #tpu.dot_dimension_numbers<[1], [0], [0], [1], [0, 0, 1, 1], [], []>} : vector<32x384xbf16>, vector<384x128xbf16>, vector<32x128xf32> -> vector<32x128xf32>
    %cst_10 = arith.constant dense<0.000000e+00> : vector<128xf32>
    %11 = vector.multi_reduction <add>, %10, %cst_10 [0] : vector<32x128xf32> to vector<128xf32>
    %12 = vector.shape_cast %11 : vector<128xf32> to vector<1x128xf32>
    %13 = arith.mulf %10, %10 : vector<32x128xf32>
    %cst_11 = arith.constant dense<0.000000e+00> : vector<128xf32>
    %14 = vector.multi_reduction <add>, %13, %cst_11 [0] : vector<32x128xf32> to vector<128xf32>
    %15 = vector.shape_cast %14 : vector<128xf32> to vector<1x128xf32>
    %16 = tpu.concatenate %12, %15 in 0 : vector<1x128xf32>, vector<1x128xf32> -> vector<2x128xf32>
    %c0_12 = arith.constant 0 : index
    %c0_13 = arith.constant 0 : index
    %17 = vector.load %arg4[%c0_12, %c0_13] : memref<128x128xf32, #tpu.memory_space<vmem>>, vector<128x128xf32>
    %cst_14 = arith.constant dense<0.000000e+00> : vector<2x128xf32>
    %18 = tpu.matmul %16, %17, %cst_14 {dimension_numbers = #tpu.dot_dimension_numbers<[1], [0], [0], [1], [0, 0, 1, 1], [], []>} : vector<2x128xf32>, vector<128x128xf32>, vector<2x128xf32> -> vector<2x128xf32>
    %19 = vector.extract_strided_slice %18 {offsets = [0, 0], sizes = [1, 128], strides = [1, 1]} : vector<2x128xf32> to vector<1x128xf32>
    %cst_15 = arith.constant 0.001953125 : f32
    %20 = vector.broadcast %cst_15 : f32 to vector<1x128xf32>
    %21 = arith.mulf %19, %20 : vector<1x128xf32>
    %22 = vector.extract_strided_slice %18 {offsets = [1, 0], sizes = [1, 128], strides = [1, 1]} : vector<2x128xf32> to vector<1x128xf32>
    %cst_16 = arith.constant 0.001953125 : f32
    %23 = vector.broadcast %cst_16 : f32 to vector<1x128xf32>
    %24 = arith.mulf %22, %23 : vector<1x128xf32>
    %25 = arith.mulf %21, %21 : vector<1x128xf32>
    %26 = arith.subf %24, %25 : vector<1x128xf32>
    %27 = vector.broadcast %21 : vector<1x128xf32> to vector<32x128xf32>
    %28 = arith.subf %10, %27 : vector<32x128xf32>
    %cst_17 = arith.constant 9.99999974E-6 : f32
    %29 = vector.broadcast %cst_17 : f32 to vector<1x128xf32>
    %30 = arith.addf %26, %29 : vector<1x128xf32>
    %31 = math.rsqrt %30 : vector<1x128xf32>
    %32 = vector.broadcast %31 : vector<1x128xf32> to vector<32x128xf32>
    %33 = arith.mulf %28, %32 : vector<32x128xf32>
    %cst_18 = arith.constant 0.000000e+00 : f32
    %34 = vector.broadcast %cst_18 : f32 to vector<32x128xf32>
    %35 = arith.maximumf %0, %34 : vector<32x128xf32>
    %36 = arith.truncf %35 : vector<32x128xf32> to vector<32x128xbf16>
    %c0_19 = arith.constant 0 : index
    %c0_20 = arith.constant 0 : index
    %37 = vector.load %arg8[%c0_19, %c0_20] : memref<128x128xbf16, #tpu.memory_space<vmem>>, vector<128x128xbf16>
    %cst_21 = arith.constant dense<0.000000e+00> : vector<32x128xf32>
    %38 = tpu.matmul %36, %37, %cst_21 {dimension_numbers = #tpu.dot_dimension_numbers<[1], [0], [0], [1], [0, 0, 1, 1], [], []>} : vector<32x128xbf16>, vector<128x128xbf16>, vector<32x128xf32> -> vector<32x128xf32>
    %cst_22 = arith.constant dense<0.000000e+00> : vector<128xf32>
    %39 = vector.multi_reduction <add>, %38, %cst_22 [0] : vector<32x128xf32> to vector<128xf32>
    %40 = vector.shape_cast %39 : vector<128xf32> to vector<1x128xf32>
    %41 = arith.mulf %38, %38 : vector<32x128xf32>
    %cst_23 = arith.constant dense<0.000000e+00> : vector<128xf32>
    %42 = vector.multi_reduction <add>, %41, %cst_23 [0] : vector<32x128xf32> to vector<128xf32>
    %43 = vector.shape_cast %42 : vector<128xf32> to vector<1x128xf32>
    %44 = tpu.concatenate %40, %43 in 0 : vector<1x128xf32>, vector<1x128xf32> -> vector<2x128xf32>
    %c0_24 = arith.constant 0 : index
    %c0_25 = arith.constant 0 : index
    %45 = vector.load %arg4[%c0_24, %c0_25] : memref<128x128xf32, #tpu.memory_space<vmem>>, vector<128x128xf32>
    %cst_26 = arith.constant dense<0.000000e+00> : vector<2x128xf32>
    %46 = tpu.matmul %44, %45, %cst_26 {dimension_numbers = #tpu.dot_dimension_numbers<[1], [0], [0], [1], [0, 0, 1, 1], [], []>} : vector<2x128xf32>, vector<128x128xf32>, vector<2x128xf32> -> vector<2x128xf32>
    %47 = vector.extract_strided_slice %46 {offsets = [0, 0], sizes = [1, 128], strides = [1, 1]} : vector<2x128xf32> to vector<1x128xf32>
    %cst_27 = arith.constant 0.001953125 : f32
    %48 = vector.broadcast %cst_27 : f32 to vector<1x128xf32>
    %49 = arith.mulf %47, %48 : vector<1x128xf32>
    %50 = vector.extract_strided_slice %46 {offsets = [1, 0], sizes = [1, 128], strides = [1, 1]} : vector<2x128xf32> to vector<1x128xf32>
    %cst_28 = arith.constant 0.001953125 : f32
    %51 = vector.broadcast %cst_28 : f32 to vector<1x128xf32>
    %52 = arith.mulf %50, %51 : vector<1x128xf32>
    %53 = arith.mulf %49, %49 : vector<1x128xf32>
    %54 = arith.subf %52, %53 : vector<1x128xf32>
    %55 = vector.broadcast %49 : vector<1x128xf32> to vector<32x128xf32>
    %56 = arith.subf %38, %55 : vector<32x128xf32>
    %cst_29 = arith.constant 9.99999974E-6 : f32
    %57 = vector.broadcast %cst_29 : f32 to vector<1x128xf32>
    %58 = arith.addf %54, %57 : vector<1x128xf32>
    %59 = math.rsqrt %58 : vector<1x128xf32>
    %60 = vector.broadcast %59 : vector<1x128xf32> to vector<32x128xf32>
    %61 = arith.mulf %56, %60 : vector<32x128xf32>
    %62 = arith.addf %61, %33 : vector<32x128xf32>
    %c0_30 = arith.constant 0 : index
    %c0_31 = arith.constant 0 : index
    %63 = vector.load %arg3[%c0_30, %c0_31] : memref<32x32xf32, #tpu.memory_space<vmem>>, vector<32x32xf32>
    %cst_32 = arith.constant dense<0.000000e+00> : vector<32x128xf32>
    %64 = tpu.matmul %63, %0, %cst_32 {dimension_numbers = #tpu.dot_dimension_numbers<[1], [0], [0], [1], [0, 0, 1, 1], [], []>} : vector<32x32xf32>, vector<32x128xf32>, vector<32x128xf32> -> vector<32x128xf32>
    %c0_33 = arith.constant 0 : index
    %c0_34 = arith.constant 0 : index
    %65 = vector.load %arg5[%c0_33, %c0_34] : memref<128x128xf32, #tpu.memory_space<vmem>>, vector<128x128xf32>
    %cst_35 = arith.constant dense<0.000000e+00> : vector<32x128xf32>
    %66 = tpu.matmul %64, %65, %cst_35 {dimension_numbers = #tpu.dot_dimension_numbers<[1], [0], [0], [1], [0, 0, 1, 1], [], []>} : vector<32x128xf32>, vector<128x128xf32>, vector<32x128xf32> -> vector<32x128xf32>
    %c0_36 = arith.constant 0 : index
    %c0_37 = arith.constant 0 : index
    %67 = vector.load %arg6[%c0_36, %c0_37] : memref<32x128xf32, #tpu.memory_space<vmem>>, vector<32x128xf32>
    %68 = arith.mulf %66, %67 : vector<32x128xf32>
    %cst_38 = arith.constant 0.000000e+00 : f32
    %69 = vector.broadcast %cst_38 : f32 to vector<32x128xf32>
    %70 = arith.maximumf %62, %69 : vector<32x128xf32>
    %c0_39 = arith.constant 0 : index
    %c0_40 = arith.constant 0 : index
    %71 = vector.load %arg1[%c0_39, %c0_40] : memref<32x32xf32, #tpu.memory_space<vmem>>, vector<32x32xf32>
    %cst_41 = arith.constant dense<0.000000e+00> : vector<32x128xf32>
    %72 = tpu.matmul %71, %70, %cst_41 {dimension_numbers = #tpu.dot_dimension_numbers<[1], [0], [0], [1], [0, 0, 1, 1], [], []>} : vector<32x32xf32>, vector<32x128xf32>, vector<32x128xf32> -> vector<32x128xf32>
    %c0_42 = arith.constant 0 : index
    %c0_43 = arith.constant 0 : index
    %73 = vector.load %arg2[%c0_42, %c0_43] : memref<32x32xf32, #tpu.memory_space<vmem>>, vector<32x32xf32>
    %cst_44 = arith.constant dense<0.000000e+00> : vector<32x128xf32>
    %74 = tpu.matmul %73, %70, %cst_44 {dimension_numbers = #tpu.dot_dimension_numbers<[1], [0], [0], [1], [0, 0, 1, 1], [], []>} : vector<32x32xf32>, vector<32x128xf32>, vector<32x128xf32> -> vector<32x128xf32>
    %75 = tpu.concatenate %72, %70, %74 in 1 : vector<32x128xf32>, vector<32x128xf32>, vector<32x128xf32> -> vector<32x384xf32>
    %76 = arith.truncf %75 : vector<32x384xf32> to vector<32x384xbf16>
    %c0_45 = arith.constant 0 : index
    %c0_46 = arith.constant 0 : index
    %77 = vector.load %arg9[%c0_45, %c0_46] : memref<384x128xbf16, #tpu.memory_space<vmem>>, vector<384x128xbf16>
    %cst_47 = arith.constant dense<0.000000e+00> : vector<32x128xf32>
    %78 = tpu.matmul %76, %77, %cst_47 {dimension_numbers = #tpu.dot_dimension_numbers<[1], [0], [0], [1], [0, 0, 1, 1], [], []>} : vector<32x384xbf16>, vector<384x128xbf16>, vector<32x128xf32> -> vector<32x128xf32>
    %cst_48 = arith.constant dense<0.000000e+00> : vector<128xf32>
    %79 = vector.multi_reduction <add>, %78, %cst_48 [0] : vector<32x128xf32> to vector<128xf32>
    %80 = vector.shape_cast %79 : vector<128xf32> to vector<1x128xf32>
    %81 = arith.mulf %78, %78 : vector<32x128xf32>
    %cst_49 = arith.constant dense<0.000000e+00> : vector<128xf32>
    %82 = vector.multi_reduction <add>, %81, %cst_49 [0] : vector<32x128xf32> to vector<128xf32>
    %83 = vector.shape_cast %82 : vector<128xf32> to vector<1x128xf32>
    %84 = tpu.concatenate %80, %83 in 0 : vector<1x128xf32>, vector<1x128xf32> -> vector<2x128xf32>
    %c0_50 = arith.constant 0 : index
    %c0_51 = arith.constant 0 : index
    %85 = vector.load %arg4[%c0_50, %c0_51] : memref<128x128xf32, #tpu.memory_space<vmem>>, vector<128x128xf32>
    %cst_52 = arith.constant dense<0.000000e+00> : vector<2x128xf32>
    %86 = tpu.matmul %84, %85, %cst_52 {dimension_numbers = #tpu.dot_dimension_numbers<[1], [0], [0], [1], [0, 0, 1, 1], [], []>} : vector<2x128xf32>, vector<128x128xf32>, vector<2x128xf32> -> vector<2x128xf32>
    %87 = vector.extract_strided_slice %86 {offsets = [0, 0], sizes = [1, 128], strides = [1, 1]} : vector<2x128xf32> to vector<1x128xf32>
    %cst_53 = arith.constant 0.001953125 : f32
    %88 = vector.broadcast %cst_53 : f32 to vector<1x128xf32>
    %89 = arith.mulf %87, %88 : vector<1x128xf32>
    %90 = vector.extract_strided_slice %86 {offsets = [1, 0], sizes = [1, 128], strides = [1, 1]} : vector<2x128xf32> to vector<1x128xf32>
    %cst_54 = arith.constant 0.001953125 : f32
    %91 = vector.broadcast %cst_54 : f32 to vector<1x128xf32>
    %92 = arith.mulf %90, %91 : vector<1x128xf32>
    %93 = arith.mulf %89, %89 : vector<1x128xf32>
    %94 = arith.subf %92, %93 : vector<1x128xf32>
    %95 = vector.broadcast %89 : vector<1x128xf32> to vector<32x128xf32>
    %96 = arith.subf %78, %95 : vector<32x128xf32>
    %cst_55 = arith.constant 9.99999974E-6 : f32
    %97 = vector.broadcast %cst_55 : f32 to vector<1x128xf32>
    %98 = arith.addf %94, %97 : vector<1x128xf32>
    %99 = math.rsqrt %98 : vector<1x128xf32>
    %100 = vector.broadcast %99 : vector<1x128xf32> to vector<32x128xf32>
    %101 = arith.mulf %96, %100 : vector<32x128xf32>
    %102 = arith.addf %68, %101 : vector<32x128xf32>
    %c0_56 = arith.constant 0 : index
    %c0_57 = arith.constant 0 : index
    %103 = vector.load %arg10[%c0_56, %c0_57] : memref<32x128xf32, #tpu.memory_space<vmem>>, vector<32x128xf32>
    tpu.vector_store %arg10[%c0_56, %c0_57], %102 {strides = array<i32>} : memref<32x128xf32, #tpu.memory_space<vmem>>, vector<32x128xf32>,
    return
  }
}

</mosaic_0001>

<llo_original>
// kernel: _lambda_.1
$region0: #{_lambda_.1}
  #allocation0 [shape = 'u32[]', space=smem, size = 0x4, offset = 0x4, fixed_abs, tag = 'smem constant byte address 0x4 - core index']
  #allocation1 [shape = 'u32[144,128]{1,0:T(1,128)}', space=vmem, size = 0x12000, scoped, tag = 'internal scratch']
  %s0 = inlined_call_operand.vmem [shape: f32[32,128], index: 0, kind: input, shape index: {}]
  %s1 = inlined_call_operand.vmem [shape: f32[32,32], index: 1, kind: input, shape index: {}]
  %s2 = inlined_call_operand.vmem [shape: f32[32,32], index: 2, kind: input, shape index: {}]
  %s3 = inlined_call_operand.vmem [shape: f32[32,32], index: 3, kind: input, shape index: {}]
  %s4 = inlined_call_operand.vmem [shape: f32[128,128], index: 4, kind: input, shape index: {}]
  %s5 = inlined_call_operand.vmem [shape: f32[128,128], index: 5, kind: input, shape index: {}]
  %s6 = inlined_call_operand.vmem [shape: f32[32,128], index: 6, kind: input, shape index: {}]
  %s7 = inlined_call_operand.vmem [shape: bf16[384,128], index: 7, kind: input, shape index: {}]
  %s8 = inlined_call_operand.vmem [shape: bf16[128,128], index: 8, kind: input, shape index: {}]
  %s9 = inlined_call_operand.vmem [shape: bf16[384,128], index: 9, kind: input, shape index: {}]
  %s10 = inlined_call_operand.vmem [shape: f32[32,128], index: 10, kind: output, shape index: {}]
  %s11 = sld [smem:[#allocation0]]
  $region50: #{_lambda_.1} parent=0
    _
  %s13 = ssub.s32 1, %s11
  %s14 = scalar_select 0, %s13, %s11
  // Predicated region
  $region2: #{_lambda_.1} parent=0 // pred_check
    _
  $region3: #{_lambda_.1} parent=0 // pred_check_branch
    %16 = sbr.rel (0) target = $region5
  $region4: #{_lambda_.1} parent=0 // pred_region
    _
  $region5: #{_lambda_.1} parent=0 // pred_fallthru
    _
  // Predicated region
  $region6: #{_lambda_.1} parent=0 // pred_check
    _
  $region7: #{_lambda_.1} parent=0 // pred_check_branch
    %18 = sbr.rel (0) target = $region9
  $region8: #{_lambda_.1} parent=0 // pred_region
    _
  $region9: #{_lambda_.1} parent=0 // pred_fallthru
    _
  // Predicated region
  $region10: #{_lambda_.1} parent=0 // pred_check
    _
  $region11: #{_lambda_.1} parent=0 // pred_check_branch
    %20 = sbr.rel (0) target = $region13
  $region12: #{_lambda_.1} parent=0 // pred_region
    _
  $region13: #{_lambda_.1} parent=0 // pred_fallthru
    _
  // Predicated region
  $region14: #{_lambda_.1} parent=0 // pred_check
    _
  $region15: #{_lambda_.1} parent=0 // pred_check_branch
    %22 = sbr.rel (0) target = $region17
  $region16: #{_lambda_.1} parent=0 // pred_region
    _
  $region17: #{_lambda_.1} parent=0 // pred_fallthru
    _
  // Predicated region
  $region18: #{_lambda_.1} parent=0 // pred_check
    _
  $region19: #{_lambda_.1} parent=0 // pred_check_branch
    %24 = sbr.rel (0) target = $region21
  $region20: #{_lambda_.1} parent=0 // pred_region
    _
  $region21: #{_lambda_.1} parent=0 // pred_fallthru
    _
  // Predicated region
  $region22: #{_lambda_.1} parent=0 // pred_check
    _
  $region23: #{_lambda_.1} parent=0 // pred_check_branch
    %26 = sbr.rel (0) target = $region25
  $region24: #{_lambda_.1} parent=0 // pred_region
    _
  $region25: #{_lambda_.1} parent=0 // pred_fallthru
    _
  // Predicated region
  $region26: #{_lambda_.1} parent=0 // pred_check
    _
  $region27: #{_lambda_.1} parent=0 // pred_check_branch
    %28 = sbr.rel (0) target = $region29
  $region28: #{_lambda_.1} parent=0 // pred_region
    _
  $region29: #{_lambda_.1} parent=0 // pred_fallthru
    _
  // Predicated region
  $region30: #{_lambda_.1} parent=0 // pred_check
    _
  $region31: #{_lambda_.1} parent=0 // pred_check_branch
    %30 = sbr.rel (0) target = $region33
  $region32: #{_lambda_.1} parent=0 // pred_region
    _
  $region33: #{_lambda_.1} parent=0 // pred_fallthru
    _
  // Predicated region
  $region34: #{_lambda_.1} parent=0 // pred_check
    _
  $region35: #{_lambda_.1} parent=0 // pred_check_branch
    %32 = sbr.rel (0) target = $region37
  $region36: #{_lambda_.1} parent=0 // pred_region
    _
  $region37: #{_lambda_.1} parent=0 // pred_fallthru
    _
  // Predicated region
  $region38: #{_lambda_.1} parent=0 // pred_check
    _
  $region39: #{_lambda_.1} parent=0 // pred_check_branch
    %34 = sbr.rel (0) target = $region41
  $region40: #{_lambda_.1} parent=0 // pred_region
    _
  $region41: #{_lambda_.1} parent=0 // pred_fallthru
    _
  %v36 = vld [vmem:[%s0] sm:$0xff]
  %v37 = vld [vmem:[%s0 + $0x8] sm:$0xff]
  %v38 = vld [vmem:[%s0 + $0x10] sm:$0xff]
  %v39 = vld [vmem:[%s0 + $0x18] sm:$0xff]
  %v40 = vmax.f32 %v36, 0.0
  %v41 = vmax.f32 %v37, 0.0
  %v42 = vmax.f32 %v38, 0.0
  %v43 = vmax.f32 %v39, 0.0
  %v44 = vld [vmem:[%s1] sm:$0xff]
  %v45 = vld [vmem:[%s1 + $0x8] sm:$0xff]
  %v46 = vld [vmem:[%s1 + $0x10] sm:$0xff]
  %v47 = vld [vmem:[%s1 + $0x18] sm:$0xff]
  %vm48 = vcmask 261120
  %v50 = vsel %vm48, %v44, 0
  %v53 = vsel %vm48, %v45, 0
  %v56 = vsel %vm48, %v46, 0
  %v59 = vsel %vm48, %v47, 0
  %61 = vmatprep.subr.mxu0 0.0
  %62 = vmatpush1.msra.mxu0 %v40
  %63 = vmatprep.subr.mxu0 0.0
  %64 = vmatpush1.msra.mxu0 %v41
  %65 = vmatprep.subr.mxu0 0.0
  %66 = vmatpush1.msra.mxu0 %v42
  %67 = vmatprep.subr.mxu0 0.0
  %68 = vmatpush1.msra.mxu0 %v43
  %69 = vmatprep.subr.mxu0 0.0
  %70 = vmatpush1.msra.mxu0 0.0
  %71 = vmatprep.subr.mxu0 0.0
  %72 = vmatpush1.msra.mxu0 0.0
  %73 = vmatprep.subr.mxu0 0.0
  %74 = vmatpush1.msra.mxu0 0.0
  %75 = vmatprep.subr.mxu0 0.0
  %76 = vmatpush1.msra.mxu0 0.0
  %77 = vmatprep.subr.mxu0 0.0
  %78 = vmatpush1.msra.mxu0 0.0
  %79 = vmatprep.subr.mxu0 0.0
  %80 = vmatpush1.msra.mxu0 0.0
  %81 = vmatprep.subr.mxu0 0.0
  %82 = vmatpush1.msra.mxu0 0.0
  %83 = vmatprep.subr.mxu0 0.0
  %84 = vmatpush1.msra.mxu0 0.0
  %85 = vmatprep.subr.mxu0 0.0
  %86 = vmatpush1.msra.mxu0 0.0
  %87 = vmatprep.subr.mxu0 0.0
  %88 = vmatpush1.msra.mxu0 0.0
  %89 = vmatprep.subr.mxu0 0.0
  %90 = vmatpush1.msra.mxu0 0.0
  %91 = vmatprep.subr.mxu0 0.0
  %92 = vmatpush1.msra.mxu0 0.0
  %93 = vmatprep.subr.mxu0 0.0
  %94 = vmatpush1.msra.mxu0 0.0
  %95 = vmatprep.subr.mxu0 0.0
  %96 = vmatpush1.msra.mxu0 0.0
  %97 = vmatprep.subr.mxu0 0.0
  %98 = vmatpush1.msra.mxu0 0.0
  %99 = vmatprep.subr.mxu0 0.0
  %100 = vmatpush1.msra.mxu0 0.0
  %101 = vmatprep.subr.mxu0 0.0
  %102 = vmatpush1.msra.mxu0 0.0
  %103 = vmatprep.subr.mxu0 0.0
  %104 = vmatpush1.msra.mxu0 0.0
  %105 = vmatprep.subr.mxu0 0.0
  %106 = vmatpush1.msra.mxu0 0.0
  %107 = vmatprep.subr.mxu0 0.0
  %108 = vmatpush1.msra.mxu0 0.0
  %109 = vmatprep.subr.mxu0 0.0
  %110 = vmatpush1.msra.mxu0 0.0
  %111 = vmatprep.subr.mxu0 0.0
  %112 = vmatpush1.msra.mxu0 0.0
  %113 = vmatprep.subr.mxu0 0.0
  %114 = vmatpush1.msra.mxu0 0.0
  %115 = vmatprep.subr.mxu0 0.0
  %116 = vmatpush1.msra.mxu0 0.0
  %117 = vmatprep.subr.mxu0 0.0
  %118 = vmatpush1.msra.mxu0 0.0
  %119 = vmatprep.subr.mxu0 0.0
  %120 = vmatpush1.msra.mxu0 0.0
  %121 = vmatprep.subr.mxu0 0.0
  %122 = vmatpush1.msra.mxu0 0.0
  %123 = vmatprep.subr.mxu0 0.0
  %124 = vmatpush1.msra.mxu0 0.0
  %125 = vmatprep.mubr.f32.mxu0 0.0
  %126 = vmatmul.mubr.f32.gmra.mrb[0].mxu0 %v50
  %v127 = vpop.f32.mrb[0].mxu0
  %v128 = vadd.f32 0.0, %v127
  %v129 = vpop.f32.mrb[0].mxu0
  %130 = vmatprep.mubr.f32.mxu0 0.0
  %131 = vmatmul.mubr.f32.gmra.mrb[0].mxu0 %v53
  %v132 = vpop.f32.mrb[0].mxu0
  %v133 = vadd.f32 0.0, %v132
  %v134 = vpop.f32.mrb[0].mxu0
  %135 = vmatprep.mubr.f32.mxu0 0.0
  %136 = vmatmul.mubr.f32.gmra.mrb[0].mxu0 %v56
  %v137 = vpop.f32.mrb[0].mxu0
  %v138 = vadd.f32 0.0, %v137
  %v139 = vpop.f32.mrb[0].mxu0
  %140 = vmatprep.mubr.f32.mxu0 0.0
  %141 = vmatmul.mubr.f32.gmra.mrb[0].mxu0 %v59
  %v142 = vpop.f32.mrb[0].mxu0
  %v143 = vadd.f32 0.0, %v142
  %v144 = vpop.f32.mrb[0].mxu0
  %145 = vdwg.mxu0
  %v146 = vld [vmem:[%s2] sm:$0xff]
  %v147 = vld [vmem:[%s2 + $0x8] sm:$0xff]
  %v148 = vld [vmem:[%s2 + $0x10] sm:$0xff]
  %v149 = vld [vmem:[%s2 + $0x18] sm:$0xff]
  %v151 = vsel %vm48, %v146, 0
  %v154 = vsel %vm48, %v147, 0
  %v157 = vsel %vm48, %v148, 0
  %v160 = vsel %vm48, %v149, 0
  %162 = vmatprep.subr.mxu0 0.0
  %163 = vmatpush1.msra.mxu0 %v40
  %164 = vmatprep.subr.mxu0 0.0
  %165 = vmatpush1.msra.mxu0 %v41
  %166 = vmatprep.subr.mxu0 0.0
  %167 = vmatpush1.msra.mxu0 %v42
  %168 = vmatprep.subr.mxu0 0.0
  %169 = vmatpush1.msra.mxu0 %v43
  %170 = vmatprep.subr.mxu0 0.0
  %171 = vmatpush1.msra.mxu0 0.0
  %172 = vmatprep.subr.mxu0 0.0
  %173 = vmatpush1.msra.mxu0 0.0
  %174 = vmatprep.subr.mxu0 0.0
  %175 = vmatpush1.msra.mxu0 0.0
  %176 = vmatprep.subr.mxu0 0.0
  %177 = vmatpush1.msra.mxu0 0.0
  %178 = vmatprep.subr.mxu0 0.0
  %179 = vmatpush1.msra.mxu0 0.0
  %180 = vmatprep.subr.mxu0 0.0
  %181 = vmatpush1.msra.mxu0 0.0
  %182 = vmatprep.subr.mxu0 0.0
  %183 = vmatpush1.msra.mxu0 0.0
  %184 = vmatprep.subr.mxu0 0.0
  %185 = vmatpush1.msra.mxu0 0.0
  %186 = vmatprep.subr.mxu0 0.0
  %187 = vmatpush1.msra.mxu0 0.0
  %188 = vmatprep.subr.mxu0 0.0
  %189 = vmatpush1.msra.mxu0 0.0
  %190 = vmatprep.subr.mxu0 0.0
  %191 = vmatpush1.msra.mxu0 0.0
  %192 = vmatprep.subr.mxu0 0.0
  %193 = vmatpush1.msra.mxu0 0.0
  %194 = vmatprep.subr.mxu0 0.0
  %195 = vmatpush1.msra.mxu0 0.0
  %196 = vmatprep.subr.mxu0 0.0
  %197 = vmatpush1.msra.mxu0 0.0
  %198 = vmatprep.subr.mxu0 0.0
  %199 = vmatpush1.msra.mxu0 0.0
  %200 = vmatprep.subr.mxu0 0.0
  %201 = vmatpush1.msra.mxu0 0.0
  %202 = vmatprep.subr.mxu0 0.0
  %203 = vmatpush1.msra.mxu0 0.0
  %204 = vmatprep.subr.mxu0 0.0
  %205 = vmatpush1.msra.mxu0 0.0
  %206 = vmatprep.subr.mxu0 0.0
  %207 = vmatpush1.msra.mxu0 0.0
  %208 = vmatprep.subr.mxu0 0.0
  %209 = vmatpush1.msra.mxu0 0.0
  %210 = vmatprep.subr.mxu0 0.0
  %211 = vmatpush1.msra.mxu0 0.0
  %212 = vmatprep.subr.mxu0 0.0
  %213 = vmatpush1.msra.mxu0 0.0
  %214 = vmatprep.subr.mxu0 0.0
  %215 = vmatpush1.msra.mxu0 0.0
  %216 = vmatprep.subr.mxu0 0.0
  %217 = vmatpush1.msra.mxu0 0.0
  %218 = vmatprep.subr.mxu0 0.0
  %219 = vmatpush1.msra.mxu0 0.0
  %220 = vmatprep.subr.mxu0 0.0
  %221 = vmatpush1.msra.mxu0 0.0
  %222 = vmatprep.subr.mxu0 0.0
  %223 = vmatpush1.msra.mxu0 0.0
  %224 = vmatprep.subr.mxu0 0.0
  %225 = vmatpush1.msra.mxu0 0.0
  %226 = vmatprep.mubr.f32.mxu0 0.0
  %227 = vmatmul.mubr.f32.gmra.mrb[0].mxu0 %v151
  %v228 = vpop.f32.mrb[0].mxu0
  %v229 = vadd.f32 0.0, %v228
  %v230 = vpop.f32.mrb[0].mxu0
  %231 = vmatprep.mubr.f32.mxu0 0.0
  %232 = vmatmul.mubr.f32.gmra.mrb[0].mxu0 %v154
  %v233 = vpop.f32.mrb[0].mxu0
  %v234 = vadd.f32 0.0, %v233
  %v235 = vpop.f32.mrb[0].mxu0
  %236 = vmatprep.mubr.f32.mxu0 0.0
  %237 = vmatmul.mubr.f32.gmra.mrb[0].mxu0 %v157
  %v238 = vpop.f32.mrb[0].mxu0
  %v239 = vadd.f32 0.0, %v238
  %v240 = vpop.f32.mrb[0].mxu0
  %241 = vmatprep.mubr.f32.mxu0 0.0
  %242 = vmatmul.mubr.f32.gmra.mrb[0].mxu0 %v160
  %v243 = vpop.f32.mrb[0].mxu0
  %v244 = vadd.f32 0.0, %v243
  %v245 = vpop.f32.mrb[0].mxu0
  %246 = vdwg.mxu0
  %v247 = vpack.c.bf16 %v133, %v128
  %v248 = vpack.c.bf16 %v41, %v40
  %v249 = vpack.c.bf16 %v234, %v229
  %v250 = vpack.c.bf16 %v143, %v138
  %v251 = vpack.c.bf16 %v43, %v42
  %v252 = vpack.c.bf16 %v244, %v239
  %v253 = vld [vmem:[%s7] sm:$0xf]
  %v254 = vld [vmem:[%s7 + $0x4] sm:$0xf]
  %v255 = vld [vmem:[%s7 + $0x8] sm:$0xf]
  %v256 = vld [vmem:[%s7 + $0xc] sm:$0xf]
  %v257 = vld [vmem:[%s7 + $0x10] sm:$0xf]
  %v258 = vld [vmem:[%s7 + $0x14] sm:$0xf]
  %v259 = vld [vmem:[%s7 + $0x18] sm:$0xf]
  %v260 = vld [vmem:[%s7 + $0x1c] sm:$0xf]
  %v261 = vld [vmem:[%s7 + $0x20] sm:$0xf]
  %v262 = vld [vmem:[%s7 + $0x24] sm:$0xf]
  %v263 = vld [vmem:[%s7 + $0x28] sm:$0xf]
  %v264 = vld [vmem:[%s7 + $0x2c] sm:$0xf]
  %v265 = vld [vmem:[%s7 + $0x30] sm:$0xf]
  %v266 = vld [vmem:[%s7 + $0x34] sm:$0xf]
  %v267 = vld [vmem:[%s7 + $0x38] sm:$0xf]
  %v268 = vld [vmem:[%s7 + $0x3c] sm:$0xf]
  %v269 = vld [vmem:[%s7 + $0x40] sm:$0xf]
  %v270 = vld [vmem:[%s7 + $0x44] sm:$0xf]
  %v271 = vld [vmem:[%s7 + $0x48] sm:$0xf]
  %v272 = vld [vmem:[%s7 + $0x4c] sm:$0xf]
  %v273 = vld [vmem:[%s7 + $0x50] sm:$0xf]
  %v274 = vld [vmem:[%s7 + $0x54] sm:$0xf]
  %v275 = vld [vmem:[%s7 + $0x58] sm:$0xf]
  %v276 = vld [vmem:[%s7 + $0x5c] sm:$0xf]
  %v277 = vld [vmem:[%s7 + $0x60] sm:$0xf]
  %v278 = vld [vmem:[%s7 + $0x64] sm:$0xf]
  %v279 = vld [vmem:[%s7 + $0x68] sm:$0xf]
  %v280 = vld [vmem:[%s7 + $0x6c] sm:$0xf]
  %v281 = vld [vmem:[%s7 + $0x70] sm:$0xf]
  %v282 = vld [vmem:[%s7 + $0x74] sm:$0xf]
  %v283 = vld [vmem:[%s7 + $0x78] sm:$0xf]
  %v284 = vld [vmem:[%s7 + $0x7c] sm:$0xf]
  %v285 = vld [vmem:[%s7 + $0x80] sm:$0xf]
  %v286 = vld [vmem:[%s7 + $0x84] sm:$0xf]
  %v287 = vld [vmem:[%s7 + $0x88] sm:$0xf]
  %v288 = vld [vmem:[%s7 + $0x8c] sm:$0xf]
  %v289 = vld [vmem:[%s7 + $0x90] sm:$0xf]
  %v290 = vld [vmem:[%s7 + $0x94] sm:$0xf]
  %v291 = vld [vmem:[%s7 + $0x98] sm:$0xf]
  %v292 = vld [vmem:[%s7 + $0x9c] sm:$0xf]
  %v293 = vld [vmem:[%s7 + $0xa0] sm:$0xf]
  %v294 = vld [vmem:[%s7 + $0xa4] sm:$0xf]
  %v295 = vld [vmem:[%s7 + $0xa8] sm:$0xf]
  %v296 = vld [vmem:[%s7 + $0xac] sm:$0xf]
  %v297 = vld [vmem:[%s7 + $0xb0] sm:$0xf]
  %v298 = vld [vmem:[%s7 + $0xb4] sm:$0xf]
  %v299 = vld [vmem:[%s7 + $0xb8] sm:$0xf]
  %v300 = vld [vmem:[%s7 + $0xbc] sm:$0xf]
  %v349 = vunpack.c.l.b16 %v253
  %v350 = vunpack.c.l.b16 %v254
  %v351 = vunpack.c.l.b16 %v255
  %v352 = vunpack.c.l.b16 %v256
  %v353 = vunpack.c.l.b16 %v257
  %v354 = vunpack.c.l.b16 %v258
  %v355 = vunpack.c.l.b16 %v259
  %v356 = vunpack.c.l.b16 %v260
  %v357 = vunpack.c.l.b16 %v261
  %v358 = vunpack.c.l.b16 %v262
  %v359 = vunpack.c.l.b16 %v263
  %v360 = vunpack.c.l.b16 %v264
  %v361 = vunpack.c.l.b16 %v265
  %v362 = vunpack.c.l.b16 %v266
  %v363 = vunpack.c.l.b16 %v267
  %v364 = vunpack.c.l.b16 %v268
  %v365 = vunpack.c.l.b16 %v269
  %v366 = vunpack.c.l.b16 %v270
  %v367 = vunpack.c.l.b16 %v271
  %v368 = vunpack.c.l.b16 %v272
  %v369 = vunpack.c.l.b16 %v273
  %v370 = vunpack.c.l.b16 %v274
  %v371 = vunpack.c.l.b16 %v275
  %v372 = vunpack.c.l.b16 %v276
  %v373 = vunpack.c.l.b16 %v277
  %v374 = vunpack.c.l.b16 %v278
  %v375 = vunpack.c.l.b16 %v279
  %v376 = vunpack.c.l.b16 %v280
  %v377 = vunpack.c.l.b16 %v281
  %v378 = vunpack.c.l.b16 %v282
  %v379 = vunpack.c.l.b16 %v283
  %v380 = vunpack.c.l.b16 %v284
  %v381 = vunpack.c.l.b16 %v285
  %v382 = vunpack.c.l.b16 %v286
  %v383 = vunpack.c.l.b16 %v287
  %v384 = vunpack.c.l.b16 %v288
  %v385 = vunpack.c.l.b16 %v289
  %v386 = vunpack.c.l.b16 %v290
  %v387 = vunpack.c.l.b16 %v291
  %v388 = vunpack.c.l.b16 %v292
  %v389 = vunpack.c.l.b16 %v293
  %v390 = vunpack.c.l.b16 %v294
  %v391 = vunpack.c.l.b16 %v295
  %v392 = vunpack.c.l.b16 %v296
  %v393 = vunpack.c.l.b16 %v297
  %v394 = vunpack.c.l.b16 %v298
  %v395 = vunpack.c.l.b16 %v299
  %v396 = vunpack.c.l.b16 %v300
  %v397 = vpack.c.b16 %v350, %v349
  %v398 = vpack.c.b16 %v352, %v351
  %v399 = vpack.c.b16 %v354, %v353
  %v400 = vpack.c.b16 %v356, %v355
  %v401 = vpack.c.b16 %v358, %v357
  %v402 = vpack.c.b16 %v360, %v359
  %v403 = vpack.c.b16 %v362, %v361
  %v404 = vpack.c.b16 %v364, %v363
  %v405 = vpack.c.b16 %v366, %v365
  %v406 = vpack.c.b16 %v368, %v367
  %v407 = vpack.c.b16 %v370, %v369
  %v408 = vpack.c.b16 %v372, %v371
  %v409 = vpack.c.b16 %v374, %v373
  %v410 = vpack.c.b16 %v376, %v375
  %v411 = vpack.c.b16 %v378, %v377
  %v412 = vpack.c.b16 %v380, %v379
  %v413 = vpack.c.b16 %v382, %v381
  %v414 = vpack.c.b16 %v384, %v383
  %v415 = vpack.c.b16 %v386, %v385
  %v416 = vpack.c.b16 %v388, %v387
  %v417 = vpack.c.b16 %v390, %v389
  %v418 = vpack.c.b16 %v392, %v391
  %v419 = vpack.c.b16 %v394, %v393
  %v420 = vpack.c.b16 %v396, %v395
  %445 = vmatprep.subr.bf16.mxu0 0
  %446 = vmatpush1.bf16.msra.mxu0 %v397
  %447 = vmatprep.subr.bf16.mxu0 0
  %448 = vmatpush1.bf16.msra.mxu0 %v398
  %449 = vmatprep.subr.bf16.mxu0 0
  %450 = vmatpush1.bf16.msra.mxu0 %v399
  %451 = vmatprep.subr.bf16.mxu0 0
  %452 = vmatpush1.bf16.msra.mxu0 %v400
  %453 = vmatprep.subr.bf16.mxu0 0
  %454 = vmatpush1.bf16.msra.mxu0 %v401
  %455 = vmatprep.subr.bf16.mxu0 0
  %456 = vmatpush1.bf16.msra.mxu0 %v402
  %457 = vmatprep.subr.bf16.mxu0 0
  %458 = vmatpush1.bf16.msra.mxu0 %v403
  %459 = vmatprep.subr.bf16.mxu0 0
  %460 = vmatpush1.bf16.msra.mxu0 %v404
  %461 = vmatprep.subr.bf16.mxu0 0
  %462 = vmatpush1.bf16.msra.mxu0 %v405
  %463 = vmatprep.subr.bf16.mxu0 0
  %464 = vmatpush1.bf16.msra.mxu0 %v406
  %465 = vmatprep.subr.bf16.mxu0 0
  %466 = vmatpush1.bf16.msra.mxu0 %v407
  %467 = vmatprep.subr.bf16.mxu0 0
  %468 = vmatpush1.bf16.msra.mxu0 %v408
  %469 = vmatprep.subr.bf16.mxu0 0
  %470 = vmatpush1.bf16.msra.mxu0 %v409
  %471 = vmatprep.subr.bf16.mxu0 0
  %472 = vmatpush1.bf16.msra.mxu0 %v410
  %473 = vmatprep.subr.bf16.mxu0 0
  %474 = vmatpush1.bf16.msra.mxu0 %v411
  %475 = vmatprep.subr.bf16.mxu0 0
  %476 = vmatpush1.bf16.msra.mxu0 %v412
  %477 = vmatprep.mubr.bf16.mxu0 %v248
  %478 = vmatmul.mubr.bf16.gmra.mrb[0].mxu0 %v247
  %v479 = vpop.f32.mrb[0].mxu0
  %v480 = vadd.f32 0.0, %v479
  %v481 = vpop.f32.mrb[0].mxu0
  %v482 = vpop.f32.mrb[0].mxu0
  %v483 = vadd.f32 0.0, %v482
  %v484 = vpop.f32.mrb[0].mxu0
  %485 = vmatprep.mubr.bf16.mxu0 %v251
  %486 = vmatmul.mubr.bf16.gmra.mrb[0].mxu0 %v250
  %v487 = vpop.f32.mrb[0].mxu0
  %v488 = vadd.f32 0.0, %v487
  %v489 = vpop.f32.mrb[0].mxu0
  %v490 = vpop.f32.mrb[0].mxu0
  %v491 = vadd.f32 0.0, %v490
  %v492 = vpop.f32.mrb[0].mxu0
  %493 = vdwg.mxu0
  %494 = vmatprep.subr.bf16.mxu0 0
  %495 = vmatpush1.bf16.msra.mxu0 %v413
  %496 = vmatprep.subr.bf16.mxu0 0
  %497 = vmatpush1.bf16.msra.mxu0 %v414
  %498 = vmatprep.subr.bf16.mxu0 0
  %499 = vmatpush1.bf16.msra.mxu0 %v415
  %500 = vmatprep.subr.bf16.mxu0 0
  %501 = vmatpush1.bf16.msra.mxu0 %v416
  %502 = vmatprep.subr.bf16.mxu0 0
  %503 = vmatpush1.bf16.msra.mxu0 %v417
  %504 = vmatprep.subr.bf16.mxu0 0
  %505 = vmatpush1.bf16.msra.mxu0 %v418
  %506 = vmatprep.subr.bf16.mxu0 0
  %507 = vmatpush1.bf16.msra.mxu0 %v419
  %508 = vmatprep.subr.bf16.mxu0 0
  %509 = vmatpush1.bf16.msra.mxu0 %v420
  %510 = vmatprep.subr.bf16.mxu0 0
  %511 = vmatpush1.bf16.msra.mxu0 0
  %512 = vmatprep.subr.bf16.mxu0 0
  %513 = vmatpush1.bf16.msra.mxu0 0
  %514 = vmatprep.subr.bf16.mxu0 0
  %515 = vmatpush1.bf16.msra.mxu0 0
  %516 = vmatprep.subr.bf16.mxu0 0
  %517 = vmatpush1.bf16.msra.mxu0 0
  %518 = vmatprep.subr.bf16.mxu0 0
  %519 = vmatpush1.bf16.msra.mxu0 0
  %520 = vmatprep.subr.bf16.mxu0 0
  %521 = vmatpush1.bf16.msra.mxu0 0
  %522 = vmatprep.subr.bf16.mxu0 0
  %523 = vmatpush1.bf16.msra.mxu0 0
  %524 = vmatprep.subr.bf16.mxu0 0
  %525 = vmatpush1.bf16.msra.mxu0 0
  %526 = vmatprep.mubr.bf16.mxu0 0
  %527 = vmatmul.mubr.bf16.gmra.mrb[0].mxu0 %v249
  %v528 = vpop.f32.mrb[0].mxu0
  %v529 = vadd.f32 %v480, %v528
  %v530 = vpop.f32.mrb[0].mxu0
  %v531 = vpop.f32.mrb[0].mxu0
  %v532 = vadd.f32 %v483, %v531
  %v533 = vpop.f32.mrb[0].mxu0
  %534 = vmatprep.mubr.bf16.mxu0 0
  %535 = vmatmul.mubr.bf16.gmra.mrb[0].mxu0 %v252
  %v536 = vpop.f32.mrb[0].mxu0
  %v537 = vadd.f32 %v488, %v536
  %v538 = vpop.f32.mrb[0].mxu0
  %v539 = vpop.f32.mrb[0].mxu0
  %v540 = vadd.f32 %v491, %v539
  %v541 = vpop.f32.mrb[0].mxu0
  %542 = vdwg.mxu0
  %v543 = vadd.f32 %v529, %v532
  %v544 = vadd.f32 %v543, %v537
  %v545 = vadd.f32 %v544, %v540
  %v546 = vrot.slane %v545, 4
  %v547 = vadd.f32 %v545, %v546
  %v548 = vrot.slane %v547, 2
  %v549 = vadd.f32 %v547, %v548
  %v550 = vrot.slane %v549, 1
  %v551 = vadd.f32 %v549, %v550
  %v552 = vmul.f32 %v529, %v529
  %v553 = vmul.f32 %v532, %v532
  %v554 = vmul.f32 %v537, %v537
  %v555 = vmul.f32 %v540, %v540
  %v556 = vadd.f32 %v552, %v553
  %v557 = vadd.f32 %v556, %v554
  %v558 = vadd.f32 %v557, %v555
  %v559 = vrot.slane %v558, 4
  %v560 = vadd.f32 %v558, %v559
  %v561 = vrot.slane %v560, 2
  %v562 = vadd.f32 %v560, %v561
  %v563 = vrot.slane %v562, 1
  %v564 = vadd.f32 %v562, %v563
  %vm565 = vcmask 1040384
  %v566 = vsel %vm565, %v551, %v564
  %v567 = vld [vmem:[%s4] sm:$0xff]
  %v568 = vld [vmem:[%s4 + $0x8] sm:$0xff]
  %v569 = vld [vmem:[%s4 + $0x10] sm:$0xff]
  %v570 = vld [vmem:[%s4 + $0x18] sm:$0xff]
  %v571 = vld [vmem:[%s4 + $0x20] sm:$0xff]
  %v572 = vld [vmem:[%s4 + $0x28] sm:$0xff]
  %v573 = vld [vmem:[%s4 + $0x30] sm:$0xff]
  %v574 = vld [vmem:[%s4 + $0x38] sm:$0xff]
  %v575 = vld [vmem:[%s4 + $0x40] sm:$0xff]
  %v576 = vld [vmem:[%s4 + $0x48] sm:$0xff]
  %v577 = vld [vmem:[%s4 + $0x50] sm:$0xff]
  %v578 = vld [vmem:[%s4 + $0x58] sm:$0xff]
  %v579 = vld [vmem:[%s4 + $0x60] sm:$0xff]
  %v580 = vld [vmem:[%s4 + $0x68] sm:$0xff]
  %v581 = vld [vmem:[%s4 + $0x70] sm:$0xff]
  %v582 = vld [vmem:[%s4 + $0x78] sm:$0xff]
  %583 = vmatprep.subr.mxu0 0.0
  %584 = vmatpush1.msra.mxu0 %v567
  %585 = vmatprep.subr.mxu0 0.0
  %586 = vmatpush1.msra.mxu0 %v568
  %587 = vmatprep.subr.mxu0 0.0
  %588 = vmatpush1.msra.mxu0 %v569
  %589 = vmatprep.subr.mxu0 0.0
  %590 = vmatpush1.msra.mxu0 %v570
  %591 = vmatprep.subr.mxu0 0.0
  %592 = vmatpush1.msra.mxu0 %v571
  %593 = vmatprep.subr.mxu0 0.0
  %594 = vmatpush1.msra.mxu0 %v572
  %595 = vmatprep.subr.mxu0 0.0
  %596 = vmatpush1.msra.mxu0 %v573
  %597 = vmatprep.subr.mxu0 0.0
  %598 = vmatpush1.msra.mxu0 %v574
  %599 = vmatprep.subr.mxu0 0.0
  %600 = vmatpush1.msra.mxu0 %v575
  %601 = vmatprep.subr.mxu0 0.0
  %602 = vmatpush1.msra.mxu0 %v576
  %603 = vmatprep.subr.mxu0 0.0
  %604 = vmatpush1.msra.mxu0 %v577
  %605 = vmatprep.subr.mxu0 0.0
  %606 = vmatpush1.msra.mxu0 %v578
  %607 = vmatprep.subr.mxu0 0.0
  %608 = vmatpush1.msra.mxu0 %v579
  %609 = vmatprep.subr.mxu0 0.0
  %610 = vmatpush1.msra.mxu0 %v580
  %611 = vmatprep.subr.mxu0 0.0
  %612 = vmatpush1.msra.mxu0 %v581
  %613 = vmatprep.subr.mxu0 0.0
  %614 = vmatpush1.msra.mxu0 %v582
  %615 = vmatprep.subr.mxu0 0.0
  %616 = vmatpush1.msra.mxu0 0.0
  %617 = vmatprep.subr.mxu0 0.0
  %618 = vmatpush1.msra.mxu0 0.0
  %619 = vmatprep.subr.mxu0 0.0
  %620 = vmatpush1.msra.mxu0 0.0
  %621 = vmatprep.subr.mxu0 0.0
  %622 = vmatpush1.msra.mxu0 0.0
  %623 = vmatprep.subr.mxu0 0.0
  %624 = vmatpush1.msra.mxu0 0.0
  %625 = vmatprep.subr.mxu0 0.0
  %626 = vmatpush1.msra.mxu0 0.0
  %627 = vmatprep.subr.mxu0 0.0
  %628 = vmatpush1.msra.mxu0 0.0
  %629 = vmatprep.subr.mxu0 0.0
  %630 = vmatpush1.msra.mxu0 0.0
  %631 = vmatprep.subr.mxu0 0.0
  %632 = vmatpush1.msra.mxu0 0.0
  %633 = vmatprep.subr.mxu0 0.0
  %634 = vmatpush1.msra.mxu0 0.0
  %635 = vmatprep.subr.mxu0 0.0
  %636 = vmatpush1.msra.mxu0 0.0
  %637 = vmatprep.subr.mxu0 0.0
  %638 = vmatpush1.msra.mxu0 0.0
  %639 = vmatprep.subr.mxu0 0.0
  %640 = vmatpush1.msra.mxu0 0.0
  %641 = vmatprep.subr.mxu0 0.0
  %642 = vmatpush1.msra.mxu0 0.0
  %643 = vmatprep.subr.mxu0 0.0
  %644 = vmatpush1.msra.mxu0 0.0
  %645 = vmatprep.subr.mxu0 0.0
  %646 = vmatpush1.msra.mxu0 0.0
  %647 = vmatprep.mubr.f32.mxu0 0.0
  %648 = vmatmul.mubr.f32.gmra.mrb[0].mxu0 %v566
  %v649 = vpop.f32.mrb[0].mxu0
  %v650 = vadd.f32 0.0, %v649
  %v651 = vpop.f32.mrb[0].mxu0
  %652 = vdwg.mxu0
  %v653 = vmul.f32 %v650, 0.001953125
  %v654 = vmul.f32 %v653, %v653
  %v656 = vrot.slane %v654, 7
  %v658 = vsub.f32 %v653, %v656
  %v659 = vlaneseq
  %v660 = vshrl.u32 %v659, 7
  %v661 = vsub.s32 0, %v660
  %v662 = vrot.slane %v653, %v661
  %v663 = vsub.f32 %v529, %v662
  %v664 = vsub.f32 %v532, %v662
  %v665 = vsub.f32 %v537, %v662
  %v666 = vsub.f32 %v540, %v662
  %v667 = vadd.f32 %v658, 1e-05
  %v668 = vrsqrt.pop %v667
  %v669 = vlaneseq
  %v670 = vshrl.u32 %v669, 7
  %v671 = vsub.s32 1, %v670
  %v672 = vrot.slane %v668, %v671
  %v673 = vmul.f32 %v663, %v672
  %v674 = vmul.f32 %v664, %v672
  %v675 = vmul.f32 %v665, %v672
  %v676 = vmul.f32 %v666, %v672
  %v677 = vld [vmem:[%s8] sm:$0xf]
  %v678 = vld [vmem:[%s8 + $0x4] sm:$0xf]
  %v679 = vld [vmem:[%s8 + $0x8] sm:$0xf]
  %v680 = vld [vmem:[%s8 + $0xc] sm:$0xf]
  %v681 = vld [vmem:[%s8 + $0x10] sm:$0xf]
  %v682 = vld [vmem:[%s8 + $0x14] sm:$0xf]
  %v683 = vld [vmem:[%s8 + $0x18] sm:$0xf]
  %v684 = vld [vmem:[%s8 + $0x1c] sm:$0xf]
  %v685 = vld [vmem:[%s8 + $0x20] sm:$0xf]
  %v686 = vld [vmem:[%s8 + $0x24] sm:$0xf]
  %v687 = vld [vmem:[%s8 + $0x28] sm:$0xf]
  %v688 = vld [vmem:[%s8 + $0x2c] sm:$0xf]
  %v689 = vld [vmem:[%s8 + $0x30] sm:$0xf]
  %v690 = vld [vmem:[%s8 + $0x34] sm:$0xf]
  %v691 = vld [vmem:[%s8 + $0x38] sm:$0xf]
  %v692 = vld [vmem:[%s8 + $0x3c] sm:$0xf]
  %v709 = vunpack.c.l.b16 %v677
  %v710 = vunpack.c.l.b16 %v678
  %v711 = vunpack.c.l.b16 %v679
  %v712 = vunpack.c.l.b16 %v680
  %v713 = vunpack.c.l.b16 %v681
  %v714 = vunpack.c.l.b16 %v682
  %v715 = vunpack.c.l.b16 %v683
  %v716 = vunpack.c.l.b16 %v684
  %v717 = vunpack.c.l.b16 %v685
  %v718 = vunpack.c.l.b16 %v686
  %v719 = vunpack.c.l.b16 %v687
  %v720 = vunpack.c.l.b16 %v688
  %v721 = vunpack.c.l.b16 %v689
  %v722 = vunpack.c.l.b16 %v690
  %v723 = vunpack.c.l.b16 %v691
  %v724 = vunpack.c.l.b16 %v692
  %v725 = vpack.c.b16 %v710, %v709
  %v726 = vpack.c.b16 %v712, %v711
  %v727 = vpack.c.b16 %v714, %v713
  %v728 = vpack.c.b16 %v716, %v715
  %v729 = vpack.c.b16 %v718, %v717
  %v730 = vpack.c.b16 %v720, %v719
  %v731 = vpack.c.b16 %v722, %v721
  %v732 = vpack.c.b16 %v724, %v723
  %741 = vmatprep.subr.bf16.mxu0 0
  %742 = vmatpush1.bf16.msra.mxu0 %v725
  %743 = vmatprep.subr.bf16.mxu0 0
  %744 = vmatpush1.bf16.msra.mxu0 %v726
  %745 = vmatprep.subr.bf16.mxu0 0
  %746 = vmatpush1.bf16.msra.mxu0 %v727
  %747 = vmatprep.subr.bf16.mxu0 0
  %748 = vmatpush1.bf16.msra.mxu0 %v728
  %749 = vmatprep.subr.bf16.mxu0 0
  %750 = vmatpush1.bf16.msra.mxu0 %v729
  %751 = vmatprep.subr.bf16.mxu0 0
  %752 = vmatpush1.bf16.msra.mxu0 %v730
  %753 = vmatprep.subr.bf16.mxu0 0
  %754 = vmatpush1.bf16.msra.mxu0 %v731
  %755 = vmatprep.subr.bf16.mxu0 0
  %756 = vmatpush1.bf16.msra.mxu0 %v732
  %757 = vmatprep.subr.bf16.mxu0 0
  %758 = vmatpush1.bf16.msra.mxu0 0
  %759 = vmatprep.subr.bf16.mxu0 0
  %760 = vmatpush1.bf16.msra.mxu0 0
  %761 = vmatprep.subr.bf16.mxu0 0
  %762 = vmatpush1.bf16.msra.mxu0 0
  %763 = vmatprep.subr.bf16.mxu0 0
  %764 = vmatpush1.bf16.msra.mxu0 0
  %765 = vmatprep.subr.bf16.mxu0 0
  %766 = vmatpush1.bf16.msra.mxu0 0
  %767 = vmatprep.subr.bf16.mxu0 0
  %768 = vmatpush1.bf16.msra.mxu0 0
  %769 = vmatprep.subr.bf16.mxu0 0
  %770 = vmatpush1.bf16.msra.mxu0 0
  %771 = vmatprep.subr.bf16.mxu0 0
  %772 = vmatpush1.bf16.msra.mxu0 0
  %773 = vmatprep.mubr.bf16.mxu0 0
  %774 = vmatmul.mubr.bf16.gmra.mrb[0].mxu0 %v248
  %v775 = vpop.f32.mrb[0].mxu0
  %v776 = vadd.f32 0.0, %v775
  %v777 = vpop.f32.mrb[0].mxu0
  %v778 = vpop.f32.mrb[0].mxu0
  %v779 = vadd.f32 0.0, %v778
  %v780 = vpop.f32.mrb[0].mxu0
  %781 = vmatprep.mubr.bf16.mxu0 0
  %782 = vmatmul.mubr.bf16.gmra.mrb[0].mxu0 %v251
  %v783 = vpop.f32.mrb[0].mxu0
  %v784 = vadd.f32 0.0, %v783
  %v785 = vpop.f32.mrb[0].mxu0
  %v786 = vpop.f32.mrb[0].mxu0
  %v787 = vadd.f32 0.0, %v786
  %v788 = vpop.f32.mrb[0].mxu0
  %789 = vdwg.mxu0
  %v790 = vadd.f32 %v776, %v779
  %v791 = vadd.f32 %v790, %v784
  %v792 = vadd.f32 %v791, %v787
  %v793 = vrot.slane %v792, 4
  %v794 = vadd.f32 %v792, %v793
  %v795 = vrot.slane %v794, 2
  %v796 = vadd.f32 %v794, %v795
  %v797 = vrot.slane %v796, 1
  %v798 = vadd.f32 %v796, %v797
  %v799 = vmul.f32 %v776, %v776
  %v800 = vmul.f32 %v779, %v779
  %v801 = vmul.f32 %v784, %v784
  %v802 = vmul.f32 %v787, %v787
  %v803 = vadd.f32 %v799, %v800
  %v804 = vadd.f32 %v803, %v801
  %v805 = vadd.f32 %v804, %v802
  %v806 = vrot.slane %v805, 4
  %v807 = vadd.f32 %v805, %v806
  %v808 = vrot.slane %v807, 2
  %v809 = vadd.f32 %v807, %v808
  %v810 = vrot.slane %v809, 1
  %v811 = vadd.f32 %v809, %v810
  %v812 = vsel %vm565, %v798, %v811
  %813 = vmatprep.subr.mxu0 0.0
  %814 = vmatpush1.msra.mxu0 %v567
  %815 = vmatprep.subr.mxu0 0.0
  %816 = vmatpush1.msra.mxu0 %v568
  %817 = vmatprep.subr.mxu0 0.0
  %818 = vmatpush1.msra.mxu0 %v569
  %819 = vmatprep.subr.mxu0 0.0
  %820 = vmatpush1.msra.mxu0 %v570
  %821 = vmatprep.subr.mxu0 0.0
  %822 = vmatpush1.msra.mxu0 %v571
  %823 = vmatprep.subr.mxu0 0.0
  %824 = vmatpush1.msra.mxu0 %v572
  %825 = vmatprep.subr.mxu0 0.0
  %826 = vmatpush1.msra.mxu0 %v573
  %827 = vmatprep.subr.mxu0 0.0
  %828 = vmatpush1.msra.mxu0 %v574
  %829 = vmatprep.subr.mxu0 0.0
  %830 = vmatpush1.msra.mxu0 %v575
  %831 = vmatprep.subr.mxu0 0.0
  %832 = vmatpush1.msra.mxu0 %v576
  %833 = vmatprep.subr.mxu0 0.0
  %834 = vmatpush1.msra.mxu0 %v577
  %835 = vmatprep.subr.mxu0 0.0
  %836 = vmatpush1.msra.mxu0 %v578
  %837 = vmatprep.subr.mxu0 0.0
  %838 = vmatpush1.msra.mxu0 %v579
  %839 = vmatprep.subr.mxu0 0.0
  %840 = vmatpush1.msra.mxu0 %v580
  %841 = vmatprep.subr.mxu0 0.0
  %842 = vmatpush1.msra.mxu0 %v581
  %843 = vmatprep.subr.mxu0 0.0
  %844 = vmatpush1.msra.mxu0 %v582
  %845 = vmatprep.subr.mxu0 0.0
  %846 = vmatpush1.msra.mxu0 0.0
  %847 = vmatprep.subr.mxu0 0.0
  %848 = vmatpush1.msra.mxu0 0.0
  %849 = vmatprep.subr.mxu0 0.0
  %850 = vmatpush1.msra.mxu0 0.0
  %851 = vmatprep.subr.mxu0 0.0
  %852 = vmatpush1.msra.mxu0 0.0
  %853 = vmatprep.subr.mxu0 0.0
  %854 = vmatpush1.msra.mxu0 0.0
  %855 = vmatprep.subr.mxu0 0.0
  %856 = vmatpush1.msra.mxu0 0.0
  %857 = vmatprep.subr.mxu0 0.0
  %858 = vmatpush1.msra.mxu0 0.0
  %859 = vmatprep.subr.mxu0 0.0
  %860 = vmatpush1.msra.mxu0 0.0
  %861 = vmatprep.subr.mxu0 0.0
  %862 = vmatpush1.msra.mxu0 0.0
  %863 = vmatprep.subr.mxu0 0.0
  %864 = vmatpush1.msra.mxu0 0.0
  %865 = vmatprep.subr.mxu0 0.0
  %866 = vmatpush1.msra.mxu0 0.0
  %867 = vmatprep.subr.mxu0 0.0
  %868 = vmatpush1.msra.mxu0 0.0
  %869 = vmatprep.subr.mxu0 0.0
  %870 = vmatpush1.msra.mxu0 0.0
  %871 = vmatprep.subr.mxu0 0.0
  %872 = vmatpush1.msra.mxu0 0.0
  %873 = vmatprep.subr.mxu0 0.0
  %874 = vmatpush1.msra.mxu0 0.0
  %875 = vmatprep.subr.mxu0 0.0
  %876 = vmatpush1.msra.mxu0 0.0
  %877 = vmatprep.mubr.f32.mxu0 0.0
  %878 = vmatmul.mubr.f32.gmra.mrb[0].mxu0 %v812
  %v879 = vpop.f32.mrb[0].mxu0
  %v880 = vadd.f32 0.0, %v879
  %v881 = vpop.f32.mrb[0].mxu0
  %882 = vdwg.mxu0
  %v883 = vmul.f32 %v880, 0.001953125
  %v884 = vmul.f32 %v883, %v883
  %v886 = vrot.slane %v884, 7
  %v888 = vsub.f32 %v883, %v886
  %v889 = vlaneseq
  %v890 = vshrl.u32 %v889, 7
  %v891 = vsub.s32 0, %v890
  %v892 = vrot.slane %v883, %v891
  %v893 = vsub.f32 %v776, %v892
  %v894 = vsub.f32 %v779, %v892
  %v895 = vsub.f32 %v784, %v892
  %v896 = vsub.f32 %v787, %v892
  %v897 = vadd.f32 %v888, 1e-05
  %v898 = vrsqrt.pop %v897
  %v899 = vlaneseq
  %v900 = vshrl.u32 %v899, 7
  %v901 = vsub.s32 1, %v900
  %v902 = vrot.slane %v898, %v901
  %v903 = vmul.f32 %v893, %v902
  %v904 = vmul.f32 %v894, %v902
  %v905 = vmul.f32 %v895, %v902
  %v906 = vmul.f32 %v896, %v902
  %v907 = vadd.f32 %v903, %v673
  %v908 = vadd.f32 %v904, %v674
  %v909 = vadd.f32 %v905, %v675
  %v910 = vadd.f32 %v906, %v676
  %v911 = vld [vmem:[%s3] sm:$0xff]
  %v912 = vld [vmem:[%s3 + $0x8] sm:$0xff]
  %v913 = vld [vmem:[%s3 + $0x10] sm:$0xff]
  %v914 = vld [vmem:[%s3 + $0x18] sm:$0xff]
  %v916 = vsel %vm48, %v911, 0
  %v919 = vsel %vm48, %v912, 0
  %v922 = vsel %vm48, %v913, 0
  %v925 = vsel %vm48, %v914, 0
  %927 = vmatprep.subr.mxu0 0.0
  %928 = vmatpush1.msra.mxu0 %v36
  %929 = vmatprep.subr.mxu0 0.0
  %930 = vmatpush1.msra.mxu0 %v37
  %931 = vmatprep.subr.mxu0 0.0
  %932 = vmatpush1.msra.mxu0 %v38
  %933 = vmatprep.subr.mxu0 0.0
  %934 = vmatpush1.msra.mxu0 %v39
  %935 = vmatprep.subr.mxu0 0.0
  %936 = vmatpush1.msra.mxu0 0.0
  %937 = vmatprep.subr.mxu0 0.0
  %938 = vmatpush1.msra.mxu0 0.0
  %939 = vmatprep.subr.mxu0 0.0
  %940 = vmatpush1.msra.mxu0 0.0
  %941 = vmatprep.subr.mxu0 0.0
  %942 = vmatpush1.msra.mxu0 0.0
  %943 = vmatprep.subr.mxu0 0.0
  %944 = vmatpush1.msra.mxu0 0.0
  %945 = vmatprep.subr.mxu0 0.0
  %946 = vmatpush1.msra.mxu0 0.0
  %947 = vmatprep.subr.mxu0 0.0
  %948 = vmatpush1.msra.mxu0 0.0
  %949 = vmatprep.subr.mxu0 0.0
  %950 = vmatpush1.msra.mxu0 0.0
  %951 = vmatprep.subr.mxu0 0.0
  %952 = vmatpush1.msra.mxu0 0.0
  %953 = vmatprep.subr.mxu0 0.0
  %954 = vmatpush1.msra.mxu0 0.0
  %955 = vmatprep.subr.mxu0 0.0
  %956 = vmatpush1.msra.mxu0 0.0
  %957 = vmatprep.subr.mxu0 0.0
  %958 = vmatpush1.msra.mxu0 0.0
  %959 = vmatprep.subr.mxu0 0.0
  %960 = vmatpush1.msra.mxu0 0.0
  %961 = vmatprep.subr.mxu0 0.0
  %962 = vmatpush1.msra.mxu0 0.0
  %963 = vmatprep.subr.mxu0 0.0
  %964 = vmatpush1.msra.mxu0 0.0
  %965 = vmatprep.subr.mxu0 0.0
  %966 = vmatpush1.msra.mxu0 0.0
  %967 = vmatprep.subr.mxu0 0.0
  %968 = vmatpush1.msra.mxu0 0.0
  %969 = vmatprep.subr.mxu0 0.0
  %970 = vmatpush1.msra.mxu0 0.0
  %971 = vmatprep.subr.mxu0 0.0
  %972 = vmatpush1.msra.mxu0 0.0
  %973 = vmatprep.subr.mxu0 0.0
  %974 = vmatpush1.msra.mxu0 0.0
  %975 = vmatprep.subr.mxu0 0.0
  %976 = vmatpush1.msra.mxu0 0.0
  %977 = vmatprep.subr.mxu0 0.0
  %978 = vmatpush1.msra.mxu0 0.0
  %979 = vmatprep.subr.mxu0 0.0
  %980 = vmatpush1.msra.mxu0 0.0
  %981 = vmatprep.subr.mxu0 0.0
  %982 = vmatpush1.msra.mxu0 0.0
  %983 = vmatprep.subr.mxu0 0.0
  %984 = vmatpush1.msra.mxu0 0.0
  %985 = vmatprep.subr.mxu0 0.0
  %986 = vmatpush1.msra.mxu0 0.0
  %987 = vmatprep.subr.mxu0 0.0
  %988 = vmatpush1.msra.mxu0 0.0
  %989 = vmatprep.subr.mxu0 0.0
  %990 = vmatpush1.msra.mxu0 0.0
  %991 = vmatprep.mubr.f32.mxu0 0.0
  %992 = vmatmul.mubr.f32.gmra.mrb[0].mxu0 %v916
  %v993 = vpop.f32.mrb[0].mxu0
  %v994 = vadd.f32 0.0, %v993
  %v995 = vpop.f32.mrb[0].mxu0
  %996 = vmatprep.mubr.f32.mxu0 0.0
  %997 = vmatmul.mubr.f32.gmra.mrb[0].mxu0 %v919
  %v998 = vpop.f32.mrb[0].mxu0
  %v999 = vadd.f32 0.0, %v998
  %v1000 = vpop.f32.mrb[0].mxu0
  %1001 = vmatprep.mubr.f32.mxu0 0.0
  %1002 = vmatmul.mubr.f32.gmra.mrb[0].mxu0 %v922
  %v1003 = vpop.f32.mrb[0].mxu0
  %v1004 = vadd.f32 0.0, %v1003
  %v1005 = vpop.f32.mrb[0].mxu0
  %1006 = vmatprep.mubr.f32.mxu0 0.0
  %1007 = vmatmul.mubr.f32.gmra.mrb[0].mxu0 %v925
  %v1008 = vpop.f32.mrb[0].mxu0
  %v1009 = vadd.f32 0.0, %v1008
  %v1010 = vpop.f32.mrb[0].mxu0
  %1011 = vdwg.mxu0
  %v1012 = vld [vmem:[%s5] sm:$0xff]
  %v1013 = vld [vmem:[%s5 + $0x8] sm:$0xff]
  %v1014 = vld [vmem:[%s5 + $0x10] sm:$0xff]
  %v1015 = vld [vmem:[%s5 + $0x18] sm:$0xff]
  %v1016 = vld [vmem:[%s5 + $0x20] sm:$0xff]
  %v1017 = vld [vmem:[%s5 + $0x28] sm:$0xff]
  %v1018 = vld [vmem:[%s5 + $0x30] sm:$0xff]
  %v1019 = vld [vmem:[%s5 + $0x38] sm:$0xff]
  %v1020 = vld [vmem:[%s5 + $0x40] sm:$0xff]
  %v1021 = vld [vmem:[%s5 + $0x48] sm:$0xff]
  %v1022 = vld [vmem:[%s5 + $0x50] sm:$0xff]
  %v1023 = vld [vmem:[%s5 + $0x58] sm:$0xff]
  %v1024 = vld [vmem:[%s5 + $0x60] sm:$0xff]
  %v1025 = vld [vmem:[%s5 + $0x68] sm:$0xff]
  %v1026 = vld [vmem:[%s5 + $0x70] sm:$0xff]
  %v1027 = vld [vmem:[%s5 + $0x78] sm:$0xff]
  %1028 = vmatprep.subr.mxu0 0.0
  %1029 = vmatpush1.msra.mxu0 %v1012
  %1030 = vmatprep.subr.mxu0 0.0
  %1031 = vmatpush1.msra.mxu0 %v1013
  %1032 = vmatprep.subr.mxu0 0.0
  %1033 = vmatpush1.msra.mxu0 %v1014
  %1034 = vmatprep.subr.mxu0 0.0
  %1035 = vmatpush1.msra.mxu0 %v1015
  %1036 = vmatprep.subr.mxu0 0.0
  %1037 = vmatpush1.msra.mxu0 %v1016
  %1038 = vmatprep.subr.mxu0 0.0
  %1039 = vmatpush1.msra.mxu0 %v1017
  %1040 = vmatprep.subr.mxu0 0.0
  %1041 = vmatpush1.msra.mxu0 %v1018
  %1042 = vmatprep.subr.mxu0 0.0
  %1043 = vmatpush1.msra.mxu0 %v1019
  %1044 = vmatprep.subr.mxu0 0.0
  %1045 = vmatpush1.msra.mxu0 %v1020
  %1046 = vmatprep.subr.mxu0 0.0
  %1047 = vmatpush1.msra.mxu0 %v1021
  %1048 = vmatprep.subr.mxu0 0.0
  %1049 = vmatpush1.msra.mxu0 %v1022
  %1050 = vmatprep.subr.mxu0 0.0
  %1051 = vmatpush1.msra.mxu0 %v1023
  %1052 = vmatprep.subr.mxu0 0.0
  %1053 = vmatpush1.msra.mxu0 %v1024
  %1054 = vmatprep.subr.mxu0 0.0
  %1055 = vmatpush1.msra.mxu0 %v1025
  %1056 = vmatprep.subr.mxu0 0.0
  %1057 = vmatpush1.msra.mxu0 %v1026
  %1058 = vmatprep.subr.mxu0 0.0
  %1059 = vmatpush1.msra.mxu0 %v1027
  %1060 = vmatprep.subr.mxu0 0.0
  %1061 = vmatpush1.msra.mxu0 0.0
  %1062 = vmatprep.subr.mxu0 0.0
  %1063 = vmatpush1.msra.mxu0 0.0
  %1064 = vmatprep.subr.mxu0 0.0
  %1065 = vmatpush1.msra.mxu0 0.0
  %1066 = vmatprep.subr.mxu0 0.0
  %1067 = vmatpush1.msra.mxu0 0.0
  %1068 = vmatprep.subr.mxu0 0.0
  %1069 = vmatpush1.msra.mxu0 0.0
  %1070 = vmatprep.subr.mxu0 0.0
  %1071 = vmatpush1.msra.mxu0 0.0
  %1072 = vmatprep.subr.mxu0 0.0
  %1073 = vmatpush1.msra.mxu0 0.0
  %1074 = vmatprep.subr.mxu0 0.0
  %1075 = vmatpush1.msra.mxu0 0.0
  %1076 = vmatprep.subr.mxu0 0.0
  %1077 = vmatpush1.msra.mxu0 0.0
  %1078 = vmatprep.subr.mxu0 0.0
  %1079 = vmatpush1.msra.mxu0 0.0
  %1080 = vmatprep.subr.mxu0 0.0
  %1081 = vmatpush1.msra.mxu0 0.0
  %1082 = vmatprep.subr.mxu0 0.0
  %1083 = vmatpush1.msra.mxu0 0.0
  %1084 = vmatprep.subr.mxu0 0.0
  %1085 = vmatpush1.msra.mxu0 0.0
  %1086 = vmatprep.subr.mxu0 0.0
  %1087 = vmatpush1.msra.mxu0 0.0
  %1088 = vmatprep.subr.mxu0 0.0
  %1089 = vmatpush1.msra.mxu0 0.0
  %1090 = vmatprep.subr.mxu0 0.0
  %1091 = vmatpush1.msra.mxu0 0.0
  %1092 = vmatprep.mubr.f32.mxu0 0.0
  %1093 = vmatmul.mubr.f32.gmra.mrb[0].mxu0 %v994
  %v1094 = vpop.f32.mrb[0].mxu0
  %v1095 = vadd.f32 0.0, %v1094
  %v1096 = vpop.f32.mrb[0].mxu0
  %1097 = vmatprep.mubr.f32.mxu0 0.0
  %1098 = vmatmul.mubr.f32.gmra.mrb[0].mxu0 %v999
  %v1099 = vpop.f32.mrb[0].mxu0
  %v1100 = vadd.f32 0.0, %v1099
  %v1101 = vpop.f32.mrb[0].mxu0
  %1102 = vmatprep.mubr.f32.mxu0 0.0
  %1103 = vmatmul.mubr.f32.gmra.mrb[0].mxu0 %v1004
  %v1104 = vpop.f32.mrb[0].mxu0
  %v1105 = vadd.f32 0.0, %v1104
  %v1106 = vpop.f32.mrb[0].mxu0
  %1107 = vmatprep.mubr.f32.mxu0 0.0
  %1108 = vmatmul.mubr.f32.gmra.mrb[0].mxu0 %v1009
  %v1109 = vpop.f32.mrb[0].mxu0
  %v1110 = vadd.f32 0.0, %v1109
  %v1111 = vpop.f32.mrb[0].mxu0
  %1112 = vdwg.mxu0
  %v1113 = vld [vmem:[%s6] sm:$0xff]
  %v1114 = vld [vmem:[%s6 + $0x8] sm:$0xff]
  %v1115 = vld [vmem:[%s6 + $0x10] sm:$0xff]
  %v1116 = vld [vmem:[%s6 + $0x18] sm:$0xff]
  %v1117 = vmul.f32 %v1095, %v1113
  %v1118 = vmul.f32 %v1100, %v1114
  %v1119 = vmul.f32 %v1105, %v1115
  %v1120 = vmul.f32 %v1110, %v1116
  %v1121 = vmax.f32 %v907, 0.0
  %v1122 = vmax.f32 %v908, 0.0
  %v1123 = vmax.f32 %v909, 0.0
  %v1124 = vmax.f32 %v910, 0.0
  %1125 = vmatprep.subr.mxu0 0.0
  %1126 = vmatpush1.msra.mxu0 %v1121
  %1127 = vmatprep.subr.mxu0 0.0
  %1128 = vmatpush1.msra.mxu0 %v1122
  %1129 = vmatprep.subr.mxu0 0.0
  %1130 = vmatpush1.msra.mxu0 %v1123
  %1131 = vmatprep.subr.mxu0 0.0
  %1132 = vmatpush1.msra.mxu0 %v1124
  %1133 = vmatprep.subr.mxu0 0.0
  %1134 = vmatpush1.msra.mxu0 0.0
  %1135 = vmatprep.subr.mxu0 0.0
  %1136 = vmatpush1.msra.mxu0 0.0
  %1137 = vmatprep.subr.mxu0 0.0
  %1138 = vmatpush1.msra.mxu0 0.0
  %1139 = vmatprep.subr.mxu0 0.0
  %1140 = vmatpush1.msra.mxu0 0.0
  %1141 = vmatprep.subr.mxu0 0.0
  %1142 = vmatpush1.msra.mxu0 0.0
  %1143 = vmatprep.subr.mxu0 0.0
  %1144 = vmatpush1.msra.mxu0 0.0
  %1145 = vmatprep.subr.mxu0 0.0
  %1146 = vmatpush1.msra.mxu0 0.0
  %1147 = vmatprep.subr.mxu0 0.0
  %1148 = vmatpush1.msra.mxu0 0.0
  %1149 = vmatprep.subr.mxu0 0.0
  %1150 = vmatpush1.msra.mxu0 0.0
  %1151 = vmatprep.subr.mxu0 0.0
  %1152 = vmatpush1.msra.mxu0 0.0
  %1153 = vmatprep.subr.mxu0 0.0
  %1154 = vmatpush1.msra.mxu0 0.0
  %1155 = vmatprep.subr.mxu0 0.0
  %1156 = vmatpush1.msra.mxu0 0.0
  %1157 = vmatprep.subr.mxu0 0.0
  %1158 = vmatpush1.msra.mxu0 0.0
  %1159 = vmatprep.subr.mxu0 0.0
  %1160 = vmatpush1.msra.mxu0 0.0
  %1161 = vmatprep.subr.mxu0 0.0
  %1162 = vmatpush1.msra.mxu0 0.0
  %1163 = vmatprep.subr.mxu0 0.0
  %1164 = vmatpush1.msra.mxu0 0.0
  %1165 = vmatprep.subr.mxu0 0.0
  %1166 = vmatpush1.msra.mxu0 0.0
  %1167 = vmatprep.subr.mxu0 0.0
  %1168 = vmatpush1.msra.mxu0 0.0
  %1169 = vmatprep.subr.mxu0 0.0
  %1170 = vmatpush1.msra.mxu0 0.0
  %1171 = vmatprep.subr.mxu0 0.0
  %1172 = vmatpush1.msra.mxu0 0.0
  %1173 = vmatprep.subr.mxu0 0.0
  %1174 = vmatpush1.msra.mxu0 0.0
  %1175 = vmatprep.subr.mxu0 0.0
  %1176 = vmatpush1.msra.mxu0 0.0
  %1177 = vmatprep.subr.mxu0 0.0
  %1178 = vmatpush1.msra.mxu0 0.0
  %1179 = vmatprep.subr.mxu0 0.0
  %1180 = vmatpush1.msra.mxu0 0.0
  %1181 = vmatprep.subr.mxu0 0.0
  %1182 = vmatpush1.msra.mxu0 0.0
  %1183 = vmatprep.subr.mxu0 0.0
  %1184 = vmatpush1.msra.mxu0 0.0
  %1185 = vmatprep.subr.mxu0 0.0
  %1186 = vmatpush1.msra.mxu0 0.0
  %1187 = vmatprep.subr.mxu0 0.0
  %1188 = vmatpush1.msra.mxu0 0.0
  %1189 = vmatprep.mubr.f32.mxu0 0.0
  %1190 = vmatmul.mubr.f32.gmra.mrb[0].mxu0 %v50
  %v1191 = vpop.f32.mrb[0].mxu0
  %v1192 = vadd.f32 0.0, %v1191
  %v1193 = vpop.f32.mrb[0].mxu0
  %1194 = vmatprep.mubr.f32.mxu0 0.0
  %1195 = vmatmul.mubr.f32.gmra.mrb[0].mxu0 %v53
  %v1196 = vpop.f32.mrb[0].mxu0
  %v1197 = vadd.f32 0.0, %v1196
  %v1198 = vpop.f32.mrb[0].mxu0
  %1199 = vmatprep.mubr.f32.mxu0 0.0
  %1200 = vmatmul.mubr.f32.gmra.mrb[0].mxu0 %v56
  %v1201 = vpop.f32.mrb[0].mxu0
  %v1202 = vadd.f32 0.0, %v1201
  %v1203 = vpop.f32.mrb[0].mxu0
  %1204 = vmatprep.mubr.f32.mxu0 0.0
  %1205 = vmatmul.mubr.f32.gmra.mrb[0].mxu0 %v59
  %v1206 = vpop.f32.mrb[0].mxu0
  %v1207 = vadd.f32 0.0, %v1206
  %v1208 = vpop.f32.mrb[0].mxu0
  %1209 = vdwg.mxu0
  %1210 = vmatprep.subr.mxu0 0.0
  %1211 = vmatpush1.msra.mxu0 %v1121
  %1212 = vmatprep.subr.mxu0 0.0
  %1213 = vmatpush1.msra.mxu0 %v1122
  %1214 = vmatprep.subr.mxu0 0.0
  %1215 = vmatpush1.msra.mxu0 %v1123
  %1216 = vmatprep.subr.mxu0 0.0
  %1217 = vmatpush1.msra.mxu0 %v1124
  %1218 = vmatprep.subr.mxu0 0.0
  %1219 = vmatpush1.msra.mxu0 0.0
  %1220 = vmatprep.subr.mxu0 0.0
  %1221 = vmatpush1.msra.mxu0 0.0
  %1222 = vmatprep.subr.mxu0 0.0
  %1223 = vmatpush1.msra.mxu0 0.0
  %1224 = vmatprep.subr.mxu0 0.0
  %1225 = vmatpush1.msra.mxu0 0.0
  %1226 = vmatprep.subr.mxu0 0.0
  %1227 = vmatpush1.msra.mxu0 0.0
  %1228 = vmatprep.subr.mxu0 0.0
  %1229 = vmatpush1.msra.mxu0 0.0
  %1230 = vmatprep.subr.mxu0 0.0
  %1231 = vmatpush1.msra.mxu0 0.0
  %1232 = vmatprep.subr.mxu0 0.0
  %1233 = vmatpush1.msra.mxu0 0.0
  %1234 = vmatprep.subr.mxu0 0.0
  %1235 = vmatpush1.msra.mxu0 0.0
  %1236 = vmatprep.subr.mxu0 0.0
  %1237 = vmatpush1.msra.mxu0 0.0
  %1238 = vmatprep.subr.mxu0 0.0
  %1239 = vmatpush1.msra.mxu0 0.0
  %1240 = vmatprep.subr.mxu0 0.0
  %1241 = vmatpush1.msra.mxu0 0.0
  %1242 = vmatprep.subr.mxu0 0.0
  %1243 = vmatpush1.msra.mxu0 0.0
  %1244 = vmatprep.subr.mxu0 0.0
  %1245 = vmatpush1.msra.mxu0 0.0
  %1246 = vmatprep.subr.mxu0 0.0
  %1247 = vmatpush1.msra.mxu0 0.0
  %1248 = vmatprep.subr.mxu0 0.0
  %1249 = vmatpush1.msra.mxu0 0.0
  %1250 = vmatprep.subr.mxu0 0.0
  %1251 = vmatpush1.msra.mxu0 0.0
  %1252 = vmatprep.subr.mxu0 0.0
  %1253 = vmatpush1.msra.mxu0 0.0
  %1254 = vmatprep.subr.mxu0 0.0
  %1255 = vmatpush1.msra.mxu0 0.0
  %1256 = vmatprep.subr.mxu0 0.0
  %1257 = vmatpush1.msra.mxu0 0.0
  %1258 = vmatprep.subr.mxu0 0.0
  %1259 = vmatpush1.msra.mxu0 0.0
  %1260 = vmatprep.subr.mxu0 0.0
  %1261 = vmatpush1.msra.mxu0 0.0
  %1262 = vmatprep.subr.mxu0 0.0
  %1263 = vmatpush1.msra.mxu0 0.0
  %1264 = vmatprep.subr.mxu0 0.0
  %1265 = vmatpush1.msra.mxu0 0.0
  %1266 = vmatprep.subr.mxu0 0.0
  %1267 = vmatpush1.msra.mxu0 0.0
  %1268 = vmatprep.subr.mxu0 0.0
  %1269 = vmatpush1.msra.mxu0 0.0
  %1270 = vmatprep.subr.mxu0 0.0
  %1271 = vmatpush1.msra.mxu0 0.0
  %1272 = vmatprep.subr.mxu0 0.0
  %1273 = vmatpush1.msra.mxu0 0.0
  %1274 = vmatprep.mubr.f32.mxu0 0.0
  %1275 = vmatmul.mubr.f32.gmra.mrb[0].mxu0 %v151
  %v1276 = vpop.f32.mrb[0].mxu0
  %v1277 = vadd.f32 0.0, %v1276
  %v1278 = vpop.f32.mrb[0].mxu0
  %1279 = vmatprep.mubr.f32.mxu0 0.0
  %1280 = vmatmul.mubr.f32.gmra.mrb[0].mxu0 %v154
  %v1281 = vpop.f32.mrb[0].mxu0
  %v1282 = vadd.f32 0.0, %v1281
  %v1283 = vpop.f32.mrb[0].mxu0
  %1284 = vmatprep.mubr.f32.mxu0 0.0
  %1285 = vmatmul.mubr.f32.gmra.mrb[0].mxu0 %v157
  %v1286 = vpop.f32.mrb[0].mxu0
  %v1287 = vadd.f32 0.0, %v1286
  %v1288 = vpop.f32.mrb[0].mxu0
  %1289 = vmatprep.mubr.f32.mxu0 0.0
  %1290 = vmatmul.mubr.f32.gmra.mrb[0].mxu0 %v160
  %v1291 = vpop.f32.mrb[0].mxu0
  %v1292 = vadd.f32 0.0, %v1291
  %v1293 = vpop.f32.mrb[0].mxu0
  %1294 = vdwg.mxu0
  %v1295 = vpack.c.bf16 %v1197, %v1192
  %v1296 = vpack.c.bf16 %v1122, %v1121
  %v1297 = vpack.c.bf16 %v1282, %v1277
  %v1298 = vpack.c.bf16 %v1207, %v1202
  %v1299 = vpack.c.bf16 %v1124, %v1123
  %v1300 = vpack.c.bf16 %v1292, %v1287
  %v1301 = vld [vmem:[%s9] sm:$0xf]
  %v1302 = vld [vmem:[%s9 + $0x4] sm:$0xf]
  %v1303 = vld [vmem:[%s9 + $0x8] sm:$0xf]
  %v1304 = vld [vmem:[%s9 + $0xc] sm:$0xf]
  %v1305 = vld [vmem:[%s9 + $0x10] sm:$0xf]
  %v1306 = vld [vmem:[%s9 + $0x14] sm:$0xf]
  %v1307 = vld [vmem:[%s9 + $0x18] sm:$0xf]
  %v1308 = vld [vmem:[%s9 + $0x1c] sm:$0xf]
  %v1309 = vld [vmem:[%s9 + $0x20] sm:$0xf]
  %v1310 = vld [vmem:[%s9 + $0x24] sm:$0xf]
  %v1311 = vld [vmem:[%s9 + $0x28] sm:$0xf]
  %v1312 = vld [vmem:[%s9 + $0x2c] sm:$0xf]
  %v1313 = vld [vmem:[%s9 + $0x30] sm:$0xf]
  %v1314 = vld [vmem:[%s9 + $0x34] sm:$0xf]
  %v1315 = vld [vmem:[%s9 + $0x38] sm:$0xf]
  %v1316 = vld [vmem:[%s9 + $0x3c] sm:$0xf]
  %v1317 = vld [vmem:[%s9 + $0x40] sm:$0xf]
  %v1318 = vld [vmem:[%s9 + $0x44] sm:$0xf]
  %v1319 = vld [vmem:[%s9 + $0x48] sm:$0xf]
  %v1320 = vld [vmem:[%s9 + $0x4c] sm:$0xf]
  %v1321 = vld [vmem:[%s9 + $0x50] sm:$0xf]
  %v1322 = vld [vmem:[%s9 + $0x54] sm:$0xf]
  %v1323 = vld [vmem:[%s9 + $0x58] sm:$0xf]
  %v1324 = vld [vmem:[%s9 + $0x5c] sm:$0xf]
  %v1325 = vld [vmem:[%s9 + $0x60] sm:$0xf]
  %v1326 = vld [vmem:[%s9 + $0x64] sm:$0xf]
  %v1327 = vld [vmem:[%s9 + $0x68] sm:$0xf]
  %v1328 = vld [vmem:[%s9 + $0x6c] sm:$0xf]
  %v1329 = vld [vmem:[%s9 + $0x70] sm:$0xf]
  %v1330 = vld [vmem:[%s9 + $0x74] sm:$0xf]
  %v1331 = vld [vmem:[%s9 + $0x78] sm:$0xf]
  %v1332 = vld [vmem:[%s9 + $0x7c] sm:$0xf]
  %v1333 = vld [vmem:[%s9 + $0x80] sm:$0xf]
  %v1334 = vld [vmem:[%s9 + $0x84] sm:$0xf]
  %v1335 = vld [vmem:[%s9 + $0x88] sm:$0xf]
  %v1336 = vld [vmem:[%s9 + $0x8c] sm:$0xf]
  %v1337 = vld [vmem:[%s9 + $0x90] sm:$0xf]
  %v1338 = vld [vmem:[%s9 + $0x94] sm:$0xf]
  %v1339 = vld [vmem:[%s9 + $0x98] sm:$0xf]
  %v1340 = vld [vmem:[%s9 + $0x9c] sm:$0xf]
  %v1341 = vld [vmem:[%s9 + $0xa0] sm:$0xf]
  %v1342 = vld [vmem:[%s9 + $0xa4] sm:$0xf]
  %v1343 = vld [vmem:[%s9 + $0xa8] sm:$0xf]
  %v1344 = vld [vmem:[%s9 + $0xac] sm:$0xf]
  %v1345 = vld [vmem:[%s9 + $0xb0] sm:$0xf]
  %v1346 = vld [vmem:[%s9 + $0xb4] sm:$0xf]
  %v1347 = vld [vmem:[%s9 + $0xb8] sm:$0xf]
  %v1348 = vld [vmem:[%s9 + $0xbc] sm:$0xf]
  %v1397 = vunpack.c.l.b16 %v1301
  %v1398 = vunpack.c.l.b16 %v1302
  %v1399 = vunpack.c.l.b16 %v1303
  %v1400 = vunpack.c.l.b16 %v1304
  %v1401 = vunpack.c.l.b16 %v1305
  %v1402 = vunpack.c.l.b16 %v1306
  %v1403 = vunpack.c.l.b16 %v1307
  %v1404 = vunpack.c.l.b16 %v1308
  %v1405 = vunpack.c.l.b16 %v1309
  %v1406 = vunpack.c.l.b16 %v1310
  %v1407 = vunpack.c.l.b16 %v1311
  %v1408 = vunpack.c.l.b16 %v1312
  %v1409 = vunpack.c.l.b16 %v1313
  %v1410 = vunpack.c.l.b16 %v1314
  %v1411 = vunpack.c.l.b16 %v1315
  %v1412 = vunpack.c.l.b16 %v1316
  %v1413 = vunpack.c.l.b16 %v1317
  %v1414 = vunpack.c.l.b16 %v1318
  %v1415 = vunpack.c.l.b16 %v1319
  %v1416 = vunpack.c.l.b16 %v1320
  %v1417 = vunpack.c.l.b16 %v1321
  %v1418 = vunpack.c.l.b16 %v1322
  %v1419 = vunpack.c.l.b16 %v1323
  %v1420 = vunpack.c.l.b16 %v1324
  %v1421 = vunpack.c.l.b16 %v1325
  %v1422 = vunpack.c.l.b16 %v1326
  %v1423 = vunpack.c.l.b16 %v1327
  %v1424 = vunpack.c.l.b16 %v1328
  %v1425 = vunpack.c.l.b16 %v1329
  %v1426 = vunpack.c.l.b16 %v1330
  %v1427 = vunpack.c.l.b16 %v1331
  %v1428 = vunpack.c.l.b16 %v1332
  %v1429 = vunpack.c.l.b16 %v1333
  %v1430 = vunpack.c.l.b16 %v1334
  %v1431 = vunpack.c.l.b16 %v1335
  %v1432 = vunpack.c.l.b16 %v1336
  %v1433 = vunpack.c.l.b16 %v1337
  %v1434 = vunpack.c.l.b16 %v1338
  %v1435 = vunpack.c.l.b16 %v1339
  %v1436 = vunpack.c.l.b16 %v1340
  %v1437 = vunpack.c.l.b16 %v1341
  %v1438 = vunpack.c.l.b16 %v1342
  %v1439 = vunpack.c.l.b16 %v1343
  %v1440 = vunpack.c.l.b16 %v1344
  %v1441 = vunpack.c.l.b16 %v1345
  %v1442 = vunpack.c.l.b16 %v1346
  %v1443 = vunpack.c.l.b16 %v1347
  %v1444 = vunpack.c.l.b16 %v1348
  %v1445 = vpack.c.b16 %v1398, %v1397
  %v1446 = vpack.c.b16 %v1400, %v1399
  %v1447 = vpack.c.b16 %v1402, %v1401
  %v1448 = vpack.c.b16 %v1404, %v1403
  %v1449 = vpack.c.b16 %v1406, %v1405
  %v1450 = vpack.c.b16 %v1408, %v1407
  %v1451 = vpack.c.b16 %v1410, %v1409
  %v1452 = vpack.c.b16 %v1412, %v1411
  %v1453 = vpack.c.b16 %v1414, %v1413
  %v1454 = vpack.c.b16 %v1416, %v1415
  %v1455 = vpack.c.b16 %v1418, %v1417
  %v1456 = vpack.c.b16 %v1420, %v1419
  %v1457 = vpack.c.b16 %v1422, %v1421
  %v1458 = vpack.c.b16 %v1424, %v1423
  %v1459 = vpack.c.b16 %v1426, %v1425
  %v1460 = vpack.c.b16 %v1428, %v1427
  %v1461 = vpack.c.b16 %v1430, %v1429
  %v1462 = vpack.c.b16 %v1432, %v1431
  %v1463 = vpack.c.b16 %v1434, %v1433
  %v1464 = vpack.c.b16 %v1436, %v1435
  %v1465 = vpack.c.b16 %v1438, %v1437
  %v1466 = vpack.c.b16 %v1440, %v1439
  %v1467 = vpack.c.b16 %v1442, %v1441
  %v1468 = vpack.c.b16 %v1444, %v1443
  %1493 = vmatprep.subr.bf16.mxu0 0
  %1494 = vmatpush1.bf16.msra.mxu0 %v1445
  %1495 = vmatprep.subr.bf16.mxu0 0
  %1496 = vmatpush1.bf16.msra.mxu0 %v1446
  %1497 = vmatprep.subr.bf16.mxu0 0
  %1498 = vmatpush1.bf16.msra.mxu0 %v1447
  %1499 = vmatprep.subr.bf16.mxu0 0
  %1500 = vmatpush1.bf16.msra.mxu0 %v1448
  %1501 = vmatprep.subr.bf16.mxu0 0
  %1502 = vmatpush1.bf16.msra.mxu0 %v1449
  %1503 = vmatprep.subr.bf16.mxu0 0
  %1504 = vmatpush1.bf16.msra.mxu0 %v1450
  %1505 = vmatprep.subr.bf16.mxu0 0
  %1506 = vmatpush1.bf16.msra.mxu0 %v1451
  %1507 = vmatprep.subr.bf16.mxu0 0
  %1508 = vmatpush1.bf16.msra.mxu0 %v1452
  %1509 = vmatprep.subr.bf16.mxu0 0
  %1510 = vmatpush1.bf16.msra.mxu0 %v1453
  %1511 = vmatprep.subr.bf16.mxu0 0
  %1512 = vmatpush1.bf16.msra.mxu0 %v1454
  %1513 = vmatprep.subr.bf16.mxu0 0
  %1514 = vmatpush1.bf16.msra.mxu0 %v1455
  %1515 = vmatprep.subr.bf16.mxu0 0
  %1516 = vmatpush1.bf16.msra.mxu0 %v1456
  %1517 = vmatprep.subr.bf16.mxu0 0
  %1518 = vmatpush1.bf16.msra.mxu0 %v1457
  %1519 = vmatprep.subr.bf16.mxu0 0
  %1520 = vmatpush1.bf16.msra.mxu0 %v1458
  %1521 = vmatprep.subr.bf16.mxu0 0
  %1522 = vmatpush1.bf16.msra.mxu0 %v1459
  %1523 = vmatprep.subr.bf16.mxu0 0
  %1524 = vmatpush1.bf16.msra.mxu0 %v1460
  %1525 = vmatprep.mubr.bf16.mxu0 %v1296
  %1526 = vmatmul.mubr.bf16.gmra.mrb[0].mxu0 %v1295
  %v1527 = vpop.f32.mrb[0].mxu0
  %v1528 = vadd.f32 0.0, %v1527
  %v1529 = vpop.f32.mrb[0].mxu0
  %v1530 = vpop.f32.mrb[0].mxu0
  %v1531 = vadd.f32 0.0, %v1530
  %v1532 = vpop.f32.mrb[0].mxu0
  %1533 = vmatprep.mubr.bf16.mxu0 %v1299
  %1534 = vmatmul.mubr.bf16.gmra.mrb[0].mxu0 %v1298
  %v1535 = vpop.f32.mrb[0].mxu0
  %v1536 = vadd.f32 0.0, %v1535
  %v1537 = vpop.f32.mrb[0].mxu0
  %v1538 = vpop.f32.mrb[0].mxu0
  %v1539 = vadd.f32 0.0, %v1538
  %v1540 = vpop.f32.mrb[0].mxu0
  %1541 = vdwg.mxu0
  %1542 = vmatprep.subr.bf16.mxu0 0
  %1543 = vmatpush1.bf16.msra.mxu0 %v1461
  %1544 = vmatprep.subr.bf16.mxu0 0
  %1545 = vmatpush1.bf16.msra.mxu0 %v1462
  %1546 = vmatprep.subr.bf16.mxu0 0
  %1547 = vmatpush1.bf16.msra.mxu0 %v1463
  %1548 = vmatprep.subr.bf16.mxu0 0
  %1549 = vmatpush1.bf16.msra.mxu0 %v1464
  %1550 = vmatprep.subr.bf16.mxu0 0
  %1551 = vmatpush1.bf16.msra.mxu0 %v1465
  %1552 = vmatprep.subr.bf16.mxu0 0
  %1553 = vmatpush1.bf16.msra.mxu0 %v1466
  %1554 = vmatprep.subr.bf16.mxu0 0
  %1555 = vmatpush1.bf16.msra.mxu0 %v1467
  %1556 = vmatprep.subr.bf16.mxu0 0
  %1557 = vmatpush1.bf16.msra.mxu0 %v1468
  %1558 = vmatprep.subr.bf16.mxu0 0
  %1559 = vmatpush1.bf16.msra.mxu0 0
  %1560 = vmatprep.subr.bf16.mxu0 0
  %1561 = vmatpush1.bf16.msra.mxu0 0
  %1562 = vmatprep.subr.bf16.mxu0 0
  %1563 = vmatpush1.bf16.msra.mxu0 0
  %1564 = vmatprep.subr.bf16.mxu0 0
  %1565 = vmatpush1.bf16.msra.mxu0 0
  %1566 = vmatprep.subr.bf16.mxu0 0
  %1567 = vmatpush1.bf16.msra.mxu0 0
  %1568 = vmatprep.subr.bf16.mxu0 0
  %1569 = vmatpush1.bf16.msra.mxu0 0
  %1570 = vmatprep.subr.bf16.mxu0 0
  %1571 = vmatpush1.bf16.msra.mxu0 0
  %1572 = vmatprep.subr.bf16.mxu0 0
  %1573 = vmatpush1.bf16.msra.mxu0 0
  %1574 = vmatprep.mubr.bf16.mxu0 0
  %1575 = vmatmul.mubr.bf16.gmra.mrb[0].mxu0 %v1297
  %v1576 = vpop.f32.mrb[0].mxu0
  %v1577 = vadd.f32 %v1528, %v1576
  %v1578 = vpop.f32.mrb[0].mxu0
  %v1579 = vpop.f32.mrb[0].mxu0
  %v1580 = vadd.f32 %v1531, %v1579
  %v1581 = vpop.f32.mrb[0].mxu0
  %1582 = vmatprep.mubr.bf16.mxu0 0
  %1583 = vmatmul.mubr.bf16.gmra.mrb[0].mxu0 %v1300
  %v1584 = vpop.f32.mrb[0].mxu0
  %v1585 = vadd.f32 %v1536, %v1584
  %v1586 = vpop.f32.mrb[0].mxu0
  %v1587 = vpop.f32.mrb[0].mxu0
  %v1588 = vadd.f32 %v1539, %v1587
  %v1589 = vpop.f32.mrb[0].mxu0
  %1590 = vdwg.mxu0
  %v1591 = vadd.f32 %v1577, %v1580
  %v1592 = vadd.f32 %v1591, %v1585
  %v1593 = vadd.f32 %v1592, %v1588
  %v1594 = vrot.slane %v1593, 4
  %v1595 = vadd.f32 %v1593, %v1594
  %v1596 = vrot.slane %v1595, 2
  %v1597 = vadd.f32 %v1595, %v1596
  %v1598 = vrot.slane %v1597, 1
  %v1599 = vadd.f32 %v1597, %v1598
  %v1600 = vmul.f32 %v1577, %v1577
  %v1601 = vmul.f32 %v1580, %v1580
  %v1602 = vmul.f32 %v1585, %v1585
  %v1603 = vmul.f32 %v1588, %v1588
  %v1604 = vadd.f32 %v1600, %v1601
  %v1605 = vadd.f32 %v1604, %v1602
  %v1606 = vadd.f32 %v1605, %v1603
  %v1607 = vrot.slane %v1606, 4
  %v1608 = vadd.f32 %v1606, %v1607
  %v1609 = vrot.slane %v1608, 2
  %v1610 = vadd.f32 %v1608, %v1609
  %v1611 = vrot.slane %v1610, 1
  %v1612 = vadd.f32 %v1610, %v1611
  %v1613 = vsel %vm565, %v1599, %v1612
  %1614 = vmatprep.subr.mxu0 0.0
  %1615 = vmatpush1.msra.mxu0 %v567
  %1616 = vmatprep.subr.mxu0 0.0
  %1617 = vmatpush1.msra.mxu0 %v568
  %1618 = vmatprep.subr.mxu0 0.0
  %1619 = vmatpush1.msra.mxu0 %v569
  %1620 = vmatprep.subr.mxu0 0.0
  %1621 = vmatpush1.msra.mxu0 %v570
  %1622 = vmatprep.subr.mxu0 0.0
  %1623 = vmatpush1.msra.mxu0 %v571
  %1624 = vmatprep.subr.mxu0 0.0
  %1625 = vmatpush1.msra.mxu0 %v572
  %1626 = vmatprep.subr.mxu0 0.0
  %1627 = vmatpush1.msra.mxu0 %v573
  %1628 = vmatprep.subr.mxu0 0.0
  %1629 = vmatpush1.msra.mxu0 %v574
  %1630 = vmatprep.subr.mxu0 0.0
  %1631 = vmatpush1.msra.mxu0 %v575
  %1632 = vmatprep.subr.mxu0 0.0
  %1633 = vmatpush1.msra.mxu0 %v576
  %1634 = vmatprep.subr.mxu0 0.0
  %1635 = vmatpush1.msra.mxu0 %v577
  %1636 = vmatprep.subr.mxu0 0.0
  %1637 = vmatpush1.msra.mxu0 %v578
  %1638 = vmatprep.subr.mxu0 0.0
  %1639 = vmatpush1.msra.mxu0 %v579
  %1640 = vmatprep.subr.mxu0 0.0
  %1641 = vmatpush1.msra.mxu0 %v580
  %1642 = vmatprep.subr.mxu0 0.0
  %1643 = vmatpush1.msra.mxu0 %v581
  %1644 = vmatprep.subr.mxu0 0.0
  %1645 = vmatpush1.msra.mxu0 %v582
  %1646 = vmatprep.subr.mxu0 0.0
  %1647 = vmatpush1.msra.mxu0 0.0
  %1648 = vmatprep.subr.mxu0 0.0
  %1649 = vmatpush1.msra.mxu0 0.0
  %1650 = vmatprep.subr.mxu0 0.0
  %1651 = vmatpush1.msra.mxu0 0.0
  %1652 = vmatprep.subr.mxu0 0.0
  %1653 = vmatpush1.msra.mxu0 0.0
  %1654 = vmatprep.subr.mxu0 0.0
  %1655 = vmatpush1.msra.mxu0 0.0
  %1656 = vmatprep.subr.mxu0 0.0
  %1657 = vmatpush1.msra.mxu0 0.0
  %1658 = vmatprep.subr.mxu0 0.0
  %1659 = vmatpush1.msra.mxu0 0.0
  %1660 = vmatprep.subr.mxu0 0.0
  %1661 = vmatpush1.msra.mxu0 0.0
  %1662 = vmatprep.subr.mxu0 0.0
  %1663 = vmatpush1.msra.mxu0 0.0
  %1664 = vmatprep.subr.mxu0 0.0
  %1665 = vmatpush1.msra.mxu0 0.0
  %1666 = vmatprep.subr.mxu0 0.0
  %1667 = vmatpush1.msra.mxu0 0.0
  %1668 = vmatprep.subr.mxu0 0.0
  %1669 = vmatpush1.msra.mxu0 0.0
  %1670 = vmatprep.subr.mxu0 0.0
  %1671 = vmatpush1.msra.mxu0 0.0
  %1672 = vmatprep.subr.mxu0 0.0
  %1673 = vmatpush1.msra.mxu0 0.0
  %1674 = vmatprep.subr.mxu0 0.0
  %1675 = vmatpush1.msra.mxu0 0.0
  %1676 = vmatprep.subr.mxu0 0.0
  %1677 = vmatpush1.msra.mxu0 0.0
  %1678 = vmatprep.mubr.f32.mxu0 0.0
  %1679 = vmatmul.mubr.f32.gmra.mrb[0].mxu0 %v1613
  %v1680 = vpop.f32.mrb[0].mxu0
  %v1681 = vadd.f32 0.0, %v1680
  %v1682 = vpop.f32.mrb[0].mxu0
  %1683 = vdwg.mxu0
  %v1684 = vmul.f32 %v1681, 0.001953125
  %v1685 = vmul.f32 %v1684, %v1684
  %v1687 = vrot.slane %v1685, 7
  %v1689 = vsub.f32 %v1684, %v1687
  %v1690 = vlaneseq
  %v1691 = vshrl.u32 %v1690, 7
  %v1692 = vsub.s32 0, %v1691
  %v1693 = vrot.slane %v1684, %v1692
  %v1694 = vsub.f32 %v1577, %v1693
  %v1695 = vsub.f32 %v1580, %v1693
  %v1696 = vsub.f32 %v1585, %v1693
  %v1697 = vsub.f32 %v1588, %v1693
  %v1698 = vadd.f32 %v1689, 1e-05
  %v1699 = vrsqrt.pop %v1698
  %v1700 = vlaneseq
  %v1701 = vshrl.u32 %v1700, 7
  %v1702 = vsub.s32 1, %v1701
  %v1703 = vrot.slane %v1699, %v1702
  %v1704 = vmul.f32 %v1694, %v1703
  %v1705 = vmul.f32 %v1695, %v1703
  %v1706 = vmul.f32 %v1696, %v1703
  %v1707 = vmul.f32 %v1697, %v1703
  %v1708 = vadd.f32 %v1117, %v1704
  %v1709 = vadd.f32 %v1118, %v1705
  %v1710 = vadd.f32 %v1119, %v1706
  %v1711 = vadd.f32 %v1120, %v1707
  %1712 = vst [vmem:[%s10] sm:$0xff] %v1708
  %1713 = vst [vmem:[%s10 + $0x8] sm:$0xff] %v1709
  %1714 = vst [vmem:[%s10 + $0x10] sm:$0xff] %v1710
  %1715 = vst [vmem:[%s10 + $0x18] sm:$0xff] %v1711
  // Predicated region
  $region42: #{_lambda_.1} parent=0 // pred_check
    _
  $region43: #{_lambda_.1} parent=0 // pred_check_branch
    %1717 = sbr.rel (0) target = $region45
  $region44: #{_lambda_.1} parent=0 // pred_region
    _
  $region45: #{_lambda_.1} parent=0 // pred_fallthru
    _
  // Predicated region
  $region46: #{_lambda_.1} parent=0 // pred_check
    _
  $region47: #{_lambda_.1} parent=0 // pred_check_branch
    %1719 = sbr.rel (0) target = $region49
  $region48: #{_lambda_.1} parent=0 // pred_region
    _
  $region49: #{_lambda_.1} parent=0 // pred_fallthru
    _

</llo_original>
